<compile_context>
chip_gen: v7x
topology: tpu7x:2x2x1
jax: 0.10.0
libtpu: 0.0.40
codegen_flags: <defaults>
</compile_context>

<pallas_src>
import functools

import jax
import jax.numpy as jnp
from jax.experimental import pallas as pl
from jax.experimental.pallas import tpu as pltpu

H1 = 400
H2 = 300
LN_EPS = 1e-5
DEFAULT_BATCH_TILE = 1024          # per-grid-step batch-row cap
SUBLANE_PACK = 16                  # bf16 LHS packs 16 rows / vreg


def _round_up(n, m):
    return ((n + m - 1) // m) * m


def _layernorm(h, gamma, beta, inv_h):
    # One-pass LN: the two cross-lane reductions are independent so the XLU
    # can pipeline them; biased variance + eps inside rsqrt matches
    # torch.nn.LayerNorm.
    s1 = jnp.sum(h, axis=-1, keepdims=True)
    s2 = jnp.sum(h * h, axis=-1, keepdims=True)
    mean = s1 * inv_h
    var = jnp.maximum(s2 * inv_h - mean * mean, 0.0)
    return (h - mean) * jax.lax.rsqrt(var + LN_EPS) * gamma + beta


def actor_kernel(x_ref,
                 w1_ref, p1_ref,
                 w2_ref, p2_ref,
                 w3_ref, b3_ref,
                 out_ref):
    x = x_ref[...]

    # fc1 -> LayerNorm(400) -> relu
    p1 = p1_ref[...]                       # (3, H1): [bias; gamma; beta]
    h = jnp.dot(x.astype(jnp.bfloat16), w1_ref[...],
                preferred_element_type=jnp.float32)
    h = h + p1[0:1, :]
    h = _layernorm(h, p1[1:2, :], p1[2:3, :], 1.0 / H1)
    h = jnp.maximum(h, 0.0)

    # fc2 -> LayerNorm(300) -> relu
    p2 = p2_ref[...]                       # (3, H2): [bias; gamma; beta]
    h = jnp.dot(h.astype(jnp.bfloat16), w2_ref[...],
                preferred_element_type=jnp.float32)
    h = h + p2[0:1, :]
    h = _layernorm(h, p2[1:2, :], p2[2:3, :], 1.0 / H2)
    h = jnp.maximum(h, 0.0)

    # fc_mu -> tanh
    h = jnp.dot(h.astype(jnp.bfloat16), w3_ref[...],
                preferred_element_type=jnp.float32)
    h = h + b3_ref[...]
    out_ref[...] = jnp.tanh(h).astype(out_ref.dtype)


def pack_actor_params(params):
    """Pack raw f32 params into the kernel layout.

    Weights -> bf16 (halves resident weight footprint, MXU-native); per-layer
    bias/gamma/beta concatenated into one (3, H) f32 block (fewer tiny
    operands).
    """
    (w1, b1, g1, be1, w2, b2, g2, be2, w3, b3) = params
    p1 = jnp.concatenate([b1, g1, be1], axis=0)   # (3, H1)
    p2 = jnp.concatenate([b2, g2, be2], axis=0)   # (3, H2)
    return (w1.astype(jnp.bfloat16), p1,
            w2.astype(jnp.bfloat16), p2,
            w3.astype(jnp.bfloat16), b3)


@functools.partial(jax.jit, static_argnames=("block_batch",))
def actor_forward(x, packed_params, block_batch=DEFAULT_BATCH_TILE):
    (w1, p1, w2, p2, w3, b3) = packed_params
    batch, state_size = x.shape
    action_size = w3.shape[1]

    # Batch-adaptive tiling:
    #   * at least 2 tiles so the "parallel" batch axis shards across both
    #     TensorCores on v7x (no effect on single-TC v5e/v6e),
    #   * tile rounded to 16 rows (bf16 sublane packing),
    #   * tile derived from the batch so padding is <= 15 rows per tile.
    n_tiles = max(2, pl.cdiv(batch, block_batch))
    tb = _round_up(pl.cdiv(batch, n_tiles), SUBLANE_PACK)
    padded = n_tiles * tb
    if padded != batch:
        # Zero rows are LN/relu/tanh-safe (constant rows -> h - mean == 0)
        # and are sliced off below.
        x = jnp.pad(x, ((0, padded - batch), (0, 0)))
    grid = (n_tiles,)

    def resident(arr):
        # Whole-array block with a constant index_map: DMA'd once, stays in
        # VMEM across all batch-grid steps.
        nd = arr.ndim
        return pl.BlockSpec(arr.shape, lambda i: (0,) * nd)

    out = pl.pallas_call(
        actor_kernel,
        out_shape=jax.ShapeDtypeStruct((padded, action_size), jnp.float32),
        grid_spec=pl.GridSpec(
            grid=grid,
            in_specs=[
                pl.BlockSpec((tb, state_size), lambda i: (i, 0)),   # x tile
                resident(w1), resident(p1),
                resident(w2), resident(p2),
                resident(w3), resident(b3),
            ],
            out_specs=pl.BlockSpec((tb, action_size), lambda i: (i, 0)),
        ),
        compiler_params=pltpu.CompilerParams(
            dimension_semantics=("parallel",),   # shard batch across TCs (v7x)
            vmem_limit_bytes=32 * 1024 * 1024,   # headroom if block_batch is
                                                 # raised (v5e default is 16 MiB)
        ),
    )(x, w1, p1, w2, p2, w3, b3)

    return out[:batch]


def init_actor_params(key, state_size, action_size):
    """Deterministic synthetic init mirroring the PyTorch __init__ shapes.

    fc1/fc2: kaiming_uniform_(nonlinearity='relu') -> U(-sqrt(6/fan_in), +)
    fc_mu : xavier_uniform_(gain=1) -> U(-sqrt(6/(fan_in+fan_out)), +)
    biases zero, LayerNorm gamma=1, beta=0.  Weights stored as [in, out], f32.
    """
    k1, k2, k3 = jax.random.split(key, 3)

    def kaiming_u(k, fan_in, fan_out):
        bound = jnp.sqrt(6.0 / fan_in)
        return jax.random.uniform(k, (fan_in, fan_out), jnp.float32, -bound, bound)

    def xavier_u(k, fan_in, fan_out):
        bound = jnp.sqrt(6.0 / (fan_in + fan_out))
        return jax.random.uniform(k, (fan_in, fan_out), jnp.float32, -bound, bound)

    w1 = kaiming_u(k1, state_size, H1)
    b1 = jnp.zeros((1, H1), jnp.float32)
    g1 = jnp.ones((1, H1), jnp.float32)
    be1 = jnp.zeros((1, H1), jnp.float32)

    w2 = kaiming_u(k2, H1, H2)
    b2 = jnp.zeros((1, H2), jnp.float32)
    g2 = jnp.ones((1, H2), jnp.float32)
    be2 = jnp.zeros((1, H2), jnp.float32)

    w3 = xavier_u(k3, H2, action_size)
    b3 = jnp.zeros((1, action_size), jnp.float32)

    return (w1, b1, g1, be1, w2, b2, g2, be2, w3, b3)


def actor_reference(x, params, matmul_dtype=jnp.float32):
    """Pure-JAX reference. matmul_dtype=bf16 mirrors the kernel's MXU path."""
    (w1, b1, g1, be1, w2, b2, g2, be2, w3, b3) = params

    def mm(a, w):
        return jnp.dot(a.astype(matmul_dtype), w.astype(matmul_dtype),
                       preferred_element_type=jnp.float32)

    def ln(h, g, b):
        mu = jnp.mean(h, axis=-1, keepdims=True)
        var = jnp.mean(jnp.square(h - mu), axis=-1, keepdims=True)
        return (h - mu) / jnp.sqrt(var + LN_EPS) * g + b

    h = jnp.maximum(ln(mm(x, w1) + b1, g1, be1), 0.0)
    h = jnp.maximum(ln(mm(h, w2) + b2, g2, be2), 0.0)
    return jnp.tanh(mm(h, w3) + b3)


if __name__ == "__main__":
    state_size = 32
    action_size = 8
    batch = 4

    key = jax.random.PRNGKey(0)
    kx, kp = jax.random.split(key)
    x = jax.random.normal(kx, (batch, state_size), jnp.float32)
    params = init_actor_params(kp, state_size, action_size)
    packed = pack_actor_params(params)

    out = actor_forward(x, packed)
    out = jax.block_until_ready(out)
    assert out.shape == (batch, action_size), out.shape

    # Compare against a reference that mirrors the kernel's bf16 matmuls
    # (kernel uses bf16 operands with f32 accumulation on the MXU).
    ref_bf16 = actor_reference(x, params, matmul_dtype=jnp.bfloat16)
    assert jnp.allclose(out, ref_bf16, atol=2e-3, rtol=2e-3), (
        float(jnp.max(jnp.abs(out - ref_bf16))))

    # Loose sanity check against the full-f32 reference (tanh-bounded output).
    ref_f32 = actor_reference(x, params, matmul_dtype=jnp.float32)
    assert jnp.allclose(out, ref_f32, atol=5e-2), (
        float(jnp.max(jnp.abs(out - ref_f32))))

    # Also exercise an awkward batch size to cover the adaptive-tile path.
    x_big = jax.random.normal(kx, (272, state_size), jnp.float32)
    out_big = jax.block_until_ready(actor_forward(x_big, packed))
    ref_big = actor_reference(x_big, params, matmul_dtype=jnp.bfloat16)
    assert out_big.shape == (272, action_size)
    assert jnp.allclose(out_big, ref_big, atol=2e-3, rtol=2e-3), (
        float(jnp.max(jnp.abs(out_big - ref_big))))

    print("KERNEL_OK")
</pallas_src>

<mosaic_0001>
module attributes {stable_mosaic.version = 11 : i64} {
  func.func @actor_kernel(%arg0: i32, %arg1: memref<16x32xf32, #tpu.memory_space<vmem>>, %arg2: memref<32x400xbf16, #tpu.memory_space<vmem>>, %arg3: memref<3x400xf32, #tpu.memory_space<vmem>>, %arg4: memref<400x300xbf16, #tpu.memory_space<vmem>>, %arg5: memref<3x300xf32, #tpu.memory_space<vmem>>, %arg6: memref<300x8xbf16, #tpu.memory_space<vmem>>, %arg7: memref<1x8xf32, #tpu.memory_space<vmem>>, %arg8: memref<16x8xf32, #tpu.memory_space<vmem>>) attributes {dimension_semantics = [#tpu.dimension_semantics<parallel>], iteration_bounds = array<i64: 2>, scalar_prefetch = 0 : i64, scratch_operands = 0 : i64, tpu.core_type = #tpu.core_type<tc>, window_params = [{transform_indices = @transform_0, window_bounds = array<i64: 16, 32>}, {pipeline_mode = #tpu.pipeline_mode<synchronous>, transform_indices = @transform_1, window_bounds = array<i64: 32, 400>}, {pipeline_mode = #tpu.pipeline_mode<synchronous>, transform_indices = @transform_2, window_bounds = array<i64: 3, 400>}, {pipeline_mode = #tpu.pipeline_mode<synchronous>, transform_indices = @transform_3, window_bounds = array<i64: 400, 300>}, {pipeline_mode = #tpu.pipeline_mode<synchronous>, transform_indices = @transform_4, window_bounds = array<i64: 3, 300>}, {pipeline_mode = #tpu.pipeline_mode<synchronous>, transform_indices = @transform_5, window_bounds = array<i64: 300, 8>}, {pipeline_mode = #tpu.pipeline_mode<synchronous>, transform_indices = @transform_6, window_bounds = array<i64: 1, 8>}, {transform_indices = @transform_7, window_bounds = array<i64: 16, 8>}]} {
    %c0 = arith.constant 0 : index
    %c0_0 = arith.constant 0 : index
    %0 = vector.load %arg1[%c0, %c0_0] : memref<16x32xf32, #tpu.memory_space<vmem>>, vector<16x32xf32>
    %c0_1 = arith.constant 0 : index
    %c0_2 = arith.constant 0 : index
    %1 = vector.load %arg3[%c0_1, %c0_2] : memref<3x400xf32, #tpu.memory_space<vmem>>, vector<3x400xf32>
    %2 = arith.truncf %0 : vector<16x32xf32> to vector<16x32xbf16>
    %c0_3 = arith.constant 0 : index
    %c0_4 = arith.constant 0 : index
    %3 = vector.load %arg2[%c0_3, %c0_4] : memref<32x400xbf16, #tpu.memory_space<vmem>>, vector<32x400xbf16>
    %cst = arith.constant dense<0.000000e+00> : vector<16x400xf32>
    %4 = tpu.matmul %2, %3, %cst {dimension_numbers = #tpu.dot_dimension_numbers<[1], [0], [0], [1], [0, 0, 1, 1], [], []>} : vector<16x32xbf16>, vector<32x400xbf16>, vector<16x400xf32> -> vector<16x400xf32>
    %5 = vector.extract_strided_slice %1 {offsets = [0, 0], sizes = [1, 400], strides = [1, 1]} : vector<3x400xf32> to vector<1x400xf32>
    %6 = vector.broadcast %5 : vector<1x400xf32> to vector<16x400xf32>
    %7 = arith.addf %4, %6 : vector<16x400xf32>
    %8 = vector.extract_strided_slice %1 {offsets = [1, 0], sizes = [1, 400], strides = [1, 1]} : vector<3x400xf32> to vector<1x400xf32>
    %9 = vector.extract_strided_slice %1 {offsets = [2, 0], sizes = [1, 400], strides = [1, 1]} : vector<3x400xf32> to vector<1x400xf32>
    %cst_5 = arith.constant dense<0.000000e+00> : vector<16xf32>
    %10 = vector.multi_reduction <add>, %7, %cst_5 [1] : vector<16x400xf32> to vector<16xf32>
    %11 = vector.shape_cast %10 : vector<16xf32> to vector<16x1xf32>
    %12 = arith.mulf %7, %7 : vector<16x400xf32>
    %cst_6 = arith.constant dense<0.000000e+00> : vector<16xf32>
    %13 = vector.multi_reduction <add>, %12, %cst_6 [1] : vector<16x400xf32> to vector<16xf32>
    %14 = vector.shape_cast %13 : vector<16xf32> to vector<16x1xf32>
    %cst_7 = arith.constant 2.500000e-03 : f32
    %15 = vector.broadcast %cst_7 : f32 to vector<16x1xf32>
    %16 = arith.mulf %11, %15 : vector<16x1xf32>
    %cst_8 = arith.constant 2.500000e-03 : f32
    %17 = vector.broadcast %cst_8 : f32 to vector<16x1xf32>
    %18 = arith.mulf %14, %17 : vector<16x1xf32>
    %19 = arith.mulf %16, %16 : vector<16x1xf32>
    %20 = arith.subf %18, %19 : vector<16x1xf32>
    %cst_9 = arith.constant 0.000000e+00 : f32
    %21 = vector.broadcast %cst_9 : f32 to vector<16x1xf32>
    %22 = arith.maximumf %20, %21 : vector<16x1xf32>
    %23 = vector.broadcast %16 : vector<16x1xf32> to vector<16x400xf32>
    %24 = arith.subf %7, %23 : vector<16x400xf32>
    %cst_10 = arith.constant 9.99999974E-6 : f32
    %25 = vector.broadcast %cst_10 : f32 to vector<16x1xf32>
    %26 = arith.addf %22, %25 : vector<16x1xf32>
    %27 = math.rsqrt %26 : vector<16x1xf32>
    %28 = vector.broadcast %27 : vector<16x1xf32> to vector<16x400xf32>
    %29 = arith.mulf %24, %28 : vector<16x400xf32>
    %30 = vector.broadcast %8 : vector<1x400xf32> to vector<16x400xf32>
    %31 = arith.mulf %29, %30 : vector<16x400xf32>
    %32 = vector.broadcast %9 : vector<1x400xf32> to vector<16x400xf32>
    %33 = arith.addf %31, %32 : vector<16x400xf32>
    %cst_11 = arith.constant 0.000000e+00 : f32
    %34 = vector.broadcast %cst_11 : f32 to vector<16x400xf32>
    %35 = arith.maximumf %33, %34 : vector<16x400xf32>
    %c0_12 = arith.constant 0 : index
    %c0_13 = arith.constant 0 : index
    %36 = vector.load %arg5[%c0_12, %c0_13] : memref<3x300xf32, #tpu.memory_space<vmem>>, vector<3x300xf32>
    %37 = arith.truncf %35 : vector<16x400xf32> to vector<16x400xbf16>
    %c0_14 = arith.constant 0 : index
    %c0_15 = arith.constant 0 : index
    %38 = vector.load %arg4[%c0_14, %c0_15] : memref<400x300xbf16, #tpu.memory_space<vmem>>, vector<400x300xbf16>
    %cst_16 = arith.constant dense<0.000000e+00> : vector<16x300xf32>
    %39 = tpu.matmul %37, %38, %cst_16 {dimension_numbers = #tpu.dot_dimension_numbers<[1], [0], [0], [1], [0, 0, 1, 1], [], []>} : vector<16x400xbf16>, vector<400x300xbf16>, vector<16x300xf32> -> vector<16x300xf32>
    %40 = vector.extract_strided_slice %36 {offsets = [0, 0], sizes = [1, 300], strides = [1, 1]} : vector<3x300xf32> to vector<1x300xf32>
    %41 = vector.broadcast %40 : vector<1x300xf32> to vector<16x300xf32>
    %42 = arith.addf %39, %41 : vector<16x300xf32>
    %43 = vector.extract_strided_slice %36 {offsets = [1, 0], sizes = [1, 300], strides = [1, 1]} : vector<3x300xf32> to vector<1x300xf32>
    %44 = vector.extract_strided_slice %36 {offsets = [2, 0], sizes = [1, 300], strides = [1, 1]} : vector<3x300xf32> to vector<1x300xf32>
    %cst_17 = arith.constant dense<0.000000e+00> : vector<16xf32>
    %45 = vector.multi_reduction <add>, %42, %cst_17 [1] : vector<16x300xf32> to vector<16xf32>
    %46 = vector.shape_cast %45 : vector<16xf32> to vector<16x1xf32>
    %47 = arith.mulf %42, %42 : vector<16x300xf32>
    %cst_18 = arith.constant dense<0.000000e+00> : vector<16xf32>
    %48 = vector.multi_reduction <add>, %47, %cst_18 [1] : vector<16x300xf32> to vector<16xf32>
    %49 = vector.shape_cast %48 : vector<16xf32> to vector<16x1xf32>
    %cst_19 = arith.constant 0.00333333341 : f32
    %50 = vector.broadcast %cst_19 : f32 to vector<16x1xf32>
    %51 = arith.mulf %46, %50 : vector<16x1xf32>
    %cst_20 = arith.constant 0.00333333341 : f32
    %52 = vector.broadcast %cst_20 : f32 to vector<16x1xf32>
    %53 = arith.mulf %49, %52 : vector<16x1xf32>
    %54 = arith.mulf %51, %51 : vector<16x1xf32>
    %55 = arith.subf %53, %54 : vector<16x1xf32>
    %cst_21 = arith.constant 0.000000e+00 : f32
    %56 = vector.broadcast %cst_21 : f32 to vector<16x1xf32>
    %57 = arith.maximumf %55, %56 : vector<16x1xf32>
    %58 = vector.broadcast %51 : vector<16x1xf32> to vector<16x300xf32>
    %59 = arith.subf %42, %58 : vector<16x300xf32>
    %cst_22 = arith.constant 9.99999974E-6 : f32
    %60 = vector.broadcast %cst_22 : f32 to vector<16x1xf32>
    %61 = arith.addf %57, %60 : vector<16x1xf32>
    %62 = math.rsqrt %61 : vector<16x1xf32>
    %63 = vector.broadcast %62 : vector<16x1xf32> to vector<16x300xf32>
    %64 = arith.mulf %59, %63 : vector<16x300xf32>
    %65 = vector.broadcast %43 : vector<1x300xf32> to vector<16x300xf32>
    %66 = arith.mulf %64, %65 : vector<16x300xf32>
    %67 = vector.broadcast %44 : vector<1x300xf32> to vector<16x300xf32>
    %68 = arith.addf %66, %67 : vector<16x300xf32>
    %cst_23 = arith.constant 0.000000e+00 : f32
    %69 = vector.broadcast %cst_23 : f32 to vector<16x300xf32>
    %70 = arith.maximumf %68, %69 : vector<16x300xf32>
    %71 = arith.truncf %70 : vector<16x300xf32> to vector<16x300xbf16>
    %c0_24 = arith.constant 0 : index
    %c0_25 = arith.constant 0 : index
    %72 = vector.load %arg6[%c0_24, %c0_25] : memref<300x8xbf16, #tpu.memory_space<vmem>>, vector<300x8xbf16>
    %cst_26 = arith.constant dense<0.000000e+00> : vector<16x8xf32>
    %73 = tpu.matmul %71, %72, %cst_26 {dimension_numbers = #tpu.dot_dimension_numbers<[1], [0], [0], [1], [0, 0, 1, 1], [], []>} : vector<16x300xbf16>, vector<300x8xbf16>, vector<16x8xf32> -> vector<16x8xf32>
    %c0_27 = arith.constant 0 : index
    %c0_28 = arith.constant 0 : index
    %74 = vector.load %arg7[%c0_27, %c0_28] : memref<1x8xf32, #tpu.memory_space<vmem>>, vector<1x8xf32>
    %75 = vector.broadcast %74 : vector<1x8xf32> to vector<16x8xf32>
    %76 = arith.addf %73, %75 : vector<16x8xf32>
    %77 = math.tanh %76 : vector<16x8xf32>
    %c0_29 = arith.constant 0 : index
    %c0_30 = arith.constant 0 : index
    %78 = vector.load %arg8[%c0_29, %c0_30] : memref<16x8xf32, #tpu.memory_space<vmem>>, vector<16x8xf32>
    tpu.vector_store %arg8[%c0_29, %c0_30], %77 {strides = array<i32>} : memref<16x8xf32, #tpu.memory_space<vmem>>, vector<16x8xf32>,
    return
  }
  func.func @transform_0(%arg0: i32) -> (i32, i32) {
    %c0_i32 = arith.constant 0 : i32
    %c0_i32_0 = arith.constant 0 : i32
    return %arg0, %c0_i32 : i32, i32
  }
  func.func @transform_1(%arg0: i32) -> (i32, i32) {
    %c0_i32 = arith.constant 0 : i32
    %c0_i32_0 = arith.constant 0 : i32
    %c0_i32_1 = arith.constant 0 : i32
    return %c0_i32, %c0_i32_0 : i32, i32
  }
  func.func @transform_2(%arg0: i32) -> (i32, i32) {
    %c0_i32 = arith.constant 0 : i32
    %c0_i32_0 = arith.constant 0 : i32
    %c0_i32_1 = arith.constant 0 : i32
    return %c0_i32, %c0_i32_0 : i32, i32
  }
  func.func @transform_3(%arg0: i32) -> (i32, i32) {
    %c0_i32 = arith.constant 0 : i32
    %c0_i32_0 = arith.constant 0 : i32
    %c0_i32_1 = arith.constant 0 : i32
    return %c0_i32, %c0_i32_0 : i32, i32
  }
  func.func @transform_4(%arg0: i32) -> (i32, i32) {
    %c0_i32 = arith.constant 0 : i32
    %c0_i32_0 = arith.constant 0 : i32
    %c0_i32_1 = arith.constant 0 : i32
    return %c0_i32, %c0_i32_0 : i32, i32
  }
  func.func @transform_5(%arg0: i32) -> (i32, i32) {
    %c0_i32 = arith.constant 0 : i32
    %c0_i32_0 = arith.constant 0 : i32
    %c0_i32_1 = arith.constant 0 : i32
    return %c0_i32, %c0_i32_0 : i32, i32
  }
  func.func @transform_6(%arg0: i32) -> (i32, i32) {
    %c0_i32 = arith.constant 0 : i32
    %c0_i32_0 = arith.constant 0 : i32
    %c0_i32_1 = arith.constant 0 : i32
    return %c0_i32, %c0_i32_0 : i32, i32
  }
  func.func @transform_7(%arg0: i32) -> (i32, i32) {
    %c0_i32 = arith.constant 0 : i32
    %c0_i32_0 = arith.constant 0 : i32
    return %arg0, %c0_i32 : i32, i32
  }
}

</mosaic_0001>

<llo_original>
// kernel: actor_forward.1
$region0: #{actor_forward.1}
  #allocation0 [shape = 'u32[]', space=smem, size = 0x4, offset = 0x4, fixed_abs, tag = 'smem constant byte address 0x4 - core index']
  #allocation1 [shape = 'u32[144,128]{1,0:T(1,128)}', space=vmem, size = 0x12000, scoped, tag = 'internal scratch']
  %s0 = inlined_call_operand.vmem [shape: f32[32,32], index: 0, kind: input, shape index: {}]
  %s1 = inlined_call_operand.vmem [shape: bf16[32,400], index: 1, kind: input, shape index: {}]
  %s2 = inlined_call_operand.vmem [shape: f32[3,400], index: 2, kind: input, shape index: {}]
  %s3 = inlined_call_operand.hbm [shape: bf16[400,300], index: 3, kind: input, shape index: {}]
  %s4 = inlined_call_operand.vmem [shape: f32[3,300], index: 4, kind: input, shape index: {}]
  %s5 = inlined_call_operand.vmem [shape: bf16[300,8], index: 5, kind: input, shape index: {}]
  %s6 = inlined_call_operand.vmem [shape: f32[1,8], index: 6, kind: input, shape index: {}]
  %s7 = inlined_call_operand.vmem [shape: f32[32,8], index: 7, kind: output, shape index: {}]
  %s8 = sld [smem:[#allocation0]]
  $region65: #{actor_forward.1} parent=0
    _
  %s10 = ssub.s32 1, %s8
  %s11 = scalar_select 0, %s10, %s8
  $region1: #{actor_forward.1} parent=0
    #allocation2 [shape = 'u8[307200]{0}', space=vmem, size = 0x4b000, scoped, tag = 'input window, operand 3, single buffered']
    #allocation3 [shape = 's32[2]{0}', space=sflag, size = 0x8, scoped, tag = 'scoped memory for actor_forward.1']
    %12 = vsyncpa [#allocation3], 0
    loop: start=0, step=1, limit=4
    $region2: #{actor_forward.1} parent=1 // loop_pre_header
      _
    $region3: #{actor_forward.1} parent=1 // loop_header
      %s14 = sphi 0, %s18
      %p15 = scmp.ge.s32.totalorder %s14, 4
      %s24 = sphi 0, %s26
      %s27 = sphi 0, %s24
      %s28 = sphi 0, %s27
      %s44 = sphi 0, %s28
      %s48 = sphi 0, %s48
      %s50 = sphi 0, %s48
      %s51 = sphi 0, %s50
      %s65 = sphi 0, %s51
      %s69 = sphi 0, %s69
      %s71 = sphi 0, %s69
      %s72 = sphi 0, %s71
      %s86 = sphi 0, %s72
      %s90 = sphi 0, %s90
      %s92 = sphi 0, %s90
      %s93 = sphi 0, %s92
      %s107 = sphi 0, %s93
      %s111 = sphi 0, %s111
      %s113 = sphi 0, %s111
      %s114 = sphi 0, %s113
      %s128 = sphi 0, %s114
      %s132 = sphi 0, %s132
      %s134 = sphi 0, %s132
      %s135 = sphi 0, %s134
      %s149 = sphi 0, %s135
      %s153 = sphi 0, %s153
      %s155 = sphi 0, %s153
      %s156 = sphi 0, %s155
      %s170 = sphi 0, %s156
      %s176 = sphi 0, %s178
      %s179 = sphi 0, %s176
      %s180 = sphi 0, %s179
      %s196 = sphi 0, %s180
    $region4: #{actor_forward.1} parent=1 // loop_header_branch
      %17 = sbr.rel (%p15) target = $region8
    $region5: #{actor_forward.1} parent=1 // loop_body
      %s19 = ssub.s32 %s14, 1
      %s20 = ssub.s32 %s14, 2
      %s21 = sadd.s32 %s14, 1
      %s22 = ssub.s32 %s14, %s21
      %p23 = scmp.eq.s32.totalorder %s22, 0
      %s25 = sadd.s32 %s24, 1
      %s26 = scalar_select %p23, %s24, %s25
      %p29 = pneg %p23
      %p30 = scmp.eq.s32.totalorder %s14, 1
      %p31 = por %p29, %p30
      %p32 = scmp.ne.s32.totalorder %s24, %s27
      %p33 = scmp.eq.s32.totalorder %s14, 0
      %p34 = por %p32, %p33
      %p35 = scmp.ne.s32.totalorder %s24, %s27
      %p36 = scmp.eq.s32.totalorder %s19, 1
      %p37 = por %p35, %p36
      %p38 = scmp.ne.s32.totalorder %s27, %s28
      %p39 = scmp.eq.s32.totalorder %s19, 0
      %p40 = por %p38, %p39
      %p41 = scmp.ne.s32.totalorder %s27, %s28
      %p42 = scmp.eq.s32.totalorder %s20, 1
      %p43 = por %p41, %p42
      %p45 = scmp.ne.s32.totalorder %s28, %s44
      %p46 = scmp.eq.s32.totalorder %s20, 0
      %p47 = por %p45, %p46
      %s49 = sadd.s32 %s48, 1
      %p52 = scmp.eq.s32.totalorder %s14, 1
      %p53 = scmp.ne.s32.totalorder %s48, %s50
      %p54 = scmp.eq.s32.totalorder %s14, 0
      %p55 = por %p53, %p54
      %p56 = scmp.ne.s32.totalorder %s48, %s50
      %p57 = scmp.eq.s32.totalorder %s19, 1
      %p58 = por %p56, %p57
      %p59 = scmp.ne.s32.totalorder %s50, %s51
      %p60 = scmp.eq.s32.totalorder %s19, 0
      %p61 = por %p59, %p60
      %p62 = scmp.ne.s32.totalorder %s50, %s51
      %p63 = scmp.eq.s32.totalorder %s20, 1
      %p64 = por %p62, %p63
      %p66 = scmp.ne.s32.totalorder %s51, %s65
      %p67 = scmp.eq.s32.totalorder %s20, 0
      %p68 = por %p66, %p67
      %s70 = sadd.s32 %s69, 1
      %p73 = scmp.eq.s32.totalorder %s14, 1
      %p74 = scmp.ne.s32.totalorder %s69, %s71
      %p75 = scmp.eq.s32.totalorder %s14, 0
      %p76 = por %p74, %p75
      %p77 = scmp.ne.s32.totalorder %s69, %s71
      %p78 = scmp.eq.s32.totalorder %s19, 1
      %p79 = por %p77, %p78
      %p80 = scmp.ne.s32.totalorder %s71, %s72
      %p81 = scmp.eq.s32.totalorder %s19, 0
      %p82 = por %p80, %p81
      %p83 = scmp.ne.s32.totalorder %s71, %s72
      %p84 = scmp.eq.s32.totalorder %s20, 1
      %p85 = por %p83, %p84
      %p87 = scmp.ne.s32.totalorder %s72, %s86
      %p88 = scmp.eq.s32.totalorder %s20, 0
      %p89 = por %p87, %p88
      %s91 = sadd.s32 %s90, 1
      %p94 = scmp.eq.s32.totalorder %s14, 1
      %p95 = scmp.ne.s32.totalorder %s90, %s92
      %p96 = scmp.eq.s32.totalorder %s14, 0
      %p97 = por %p95, %p96
      %p98 = scmp.ne.s32.totalorder %s90, %s92
      %p99 = scmp.eq.s32.totalorder %s19, 1
      %p100 = por %p98, %p99
      %p101 = scmp.ne.s32.totalorder %s92, %s93
      %p102 = scmp.eq.s32.totalorder %s19, 0
      %p103 = por %p101, %p102
      %p104 = scmp.ne.s32.totalorder %s92, %s93
      %p105 = scmp.eq.s32.totalorder %s20, 1
      %p106 = por %p104, %p105
      %p108 = scmp.ne.s32.totalorder %s93, %s107
      %p109 = scmp.eq.s32.totalorder %s20, 0
      %p110 = por %p108, %p109
      %s112 = sadd.s32 %s111, 1
      %p115 = scmp.eq.s32.totalorder %s14, 1
      %p116 = scmp.ne.s32.totalorder %s111, %s113
      %p117 = scmp.eq.s32.totalorder %s14, 0
      %p118 = por %p116, %p117
      %p119 = scmp.ne.s32.totalorder %s111, %s113
      %p120 = scmp.eq.s32.totalorder %s19, 1
      %p121 = por %p119, %p120
      %p122 = scmp.ne.s32.totalorder %s113, %s114
      %p123 = scmp.eq.s32.totalorder %s19, 0
      %p124 = por %p122, %p123
      %p125 = scmp.ne.s32.totalorder %s113, %s114
      %p126 = scmp.eq.s32.totalorder %s20, 1
      %p127 = por %p125, %p126
      %p129 = scmp.ne.s32.totalorder %s114, %s128
      %p130 = scmp.eq.s32.totalorder %s20, 0
      %p131 = por %p129, %p130
      %s133 = sadd.s32 %s132, 1
      %p136 = scmp.eq.s32.totalorder %s14, 1
      %p137 = scmp.ne.s32.totalorder %s132, %s134
      %p138 = scmp.eq.s32.totalorder %s14, 0
      %p139 = por %p137, %p138
      %p140 = scmp.ne.s32.totalorder %s132, %s134
      %p141 = scmp.eq.s32.totalorder %s19, 1
      %p142 = por %p140, %p141
      %p143 = scmp.ne.s32.totalorder %s134, %s135
      %p144 = scmp.eq.s32.totalorder %s19, 0
      %p145 = por %p143, %p144
      %p146 = scmp.ne.s32.totalorder %s134, %s135
      %p147 = scmp.eq.s32.totalorder %s20, 1
      %p148 = por %p146, %p147
      %p150 = scmp.ne.s32.totalorder %s135, %s149
      %p151 = scmp.eq.s32.totalorder %s20, 0
      %p152 = por %p150, %p151
      %s154 = sadd.s32 %s153, 1
      %p157 = scmp.eq.s32.totalorder %s14, 1
      %p158 = scmp.ne.s32.totalorder %s153, %s155
      %p159 = scmp.eq.s32.totalorder %s14, 0
      %p160 = por %p158, %p159
      %p161 = scmp.ne.s32.totalorder %s153, %s155
      %p162 = scmp.eq.s32.totalorder %s19, 1
      %p163 = por %p161, %p162
      %p164 = scmp.ne.s32.totalorder %s155, %s156
      %p165 = scmp.eq.s32.totalorder %s19, 0
      %p166 = por %p164, %p165
      %p167 = scmp.ne.s32.totalorder %s155, %s156
      %p168 = scmp.eq.s32.totalorder %s20, 1
      %p169 = por %p167, %p168
      %p171 = scmp.ne.s32.totalorder %s156, %s170
      %p172 = scmp.eq.s32.totalorder %s20, 0
      %p173 = por %p171, %p172
      %s174 = ssub.s32 %s14, %s21
      %p175 = scmp.eq.s32.totalorder %s174, 0
      %s177 = sadd.s32 %s176, 1
      %s178 = scalar_select %p175, %s176, %s177
      %p181 = pneg %p175
      %p182 = scmp.eq.s32.totalorder %s14, 1
      %p183 = por %p181, %p182
      %p184 = scmp.ne.s32.totalorder %s176, %s179
      %p185 = scmp.eq.s32.totalorder %s14, 0
      %p186 = por %p184, %p185
      %p187 = scmp.ne.s32.totalorder %s176, %s179
      %p188 = scmp.eq.s32.totalorder %s19, 1
      %p189 = por %p187, %p188
      %p190 = scmp.ne.s32.totalorder %s179, %s180
      %p191 = scmp.eq.s32.totalorder %s19, 0
      %p192 = por %p190, %p191
      %p193 = scmp.ne.s32.totalorder %s179, %s180
      %p194 = scmp.eq.s32.totalorder %s20, 1
      %p195 = por %p193, %p194
      %p197 = scmp.ne.s32.totalorder %s180, %s196
      %p198 = scmp.eq.s32.totalorder %s20, 0
      %p199 = por %p197, %p198
      %p200 = scmp.le.s32.totalorder 1, %s14
      %p201 = scmp.lt.s32.totalorder %s14, 3
      %p202 = pnand %p200, %p201
      %p203 = pneg %p202
      // Predicated region
      $region9: #{actor_forward.1} parent=5 // pred_check
        _
      $region10: #{actor_forward.1} parent=5 // pred_check_branch
        %205 = sbr.rel (%p202) target = $region12
      $region11: #{actor_forward.1} parent=5 // pred_region
        %s206 = ssub.s32 %s14, 1
        // Predicated region
        $region13: #{actor_forward.1} parent=11 // pred_check
          %p207 = pneg %p61
        $region14: #{actor_forward.1} parent=11 // pred_check_branch
          %209 = sbr.rel (%p207) target = $region16
        $region15: #{actor_forward.1} parent=11 // pred_region
          _
        $region16: #{actor_forward.1} parent=11 // pred_fallthru
          _
        // Predicated region
        $region17: #{actor_forward.1} parent=11 // pred_check
          %p210 = pneg %p82
        $region18: #{actor_forward.1} parent=11 // pred_check_branch
          %212 = sbr.rel (%p210) target = $region20
        $region19: #{actor_forward.1} parent=11 // pred_region
          _
        $region20: #{actor_forward.1} parent=11 // pred_fallthru
          _
        // Predicated region
        $region21: #{actor_forward.1} parent=11 // pred_check
          %p213 = pneg %p103
        $region22: #{actor_forward.1} parent=11 // pred_check_branch
          %215 = sbr.rel (%p213) target = $region24
        $region23: #{actor_forward.1} parent=11 // pred_region
          %s217 = ssub.s32 9600, 9600
          %218 = vsyncadd [#allocation3], %s217
          %s219 = sshll.u32 [#allocation2], 4
          %s220 = int_to_ptr.vmem [resolvable:$true] %s219
          %225 = dma.hbm_to_vmem [thread:$0]  %s3, 9600, %s220, [#allocation3], 192, 192, 12
        $region24: #{actor_forward.1} parent=11 // pred_fallthru
          _
        // Predicated region
        $region25: #{actor_forward.1} parent=11 // pred_check
          %p226 = pneg %p124
        $region26: #{actor_forward.1} parent=11 // pred_check_branch
          %228 = sbr.rel (%p226) target = $region28
        $region27: #{actor_forward.1} parent=11 // pred_region
          _
        $region28: #{actor_forward.1} parent=11 // pred_fallthru
          _
        // Predicated region
        $region29: #{actor_forward.1} parent=11 // pred_check
          %p229 = pneg %p145
        $region30: #{actor_forward.1} parent=11 // pred_check_branch
          %231 = sbr.rel (%p229) target = $region32
        $region31: #{actor_forward.1} parent=11 // pred_region
          _
        $region32: #{actor_forward.1} parent=11 // pred_fallthru
          _
        // Predicated region
        $region33: #{actor_forward.1} parent=11 // pred_check
          %p232 = pneg %p166
        $region34: #{actor_forward.1} parent=11 // pred_check_branch
          %234 = sbr.rel (%p232) target = $region36
        $region35: #{actor_forward.1} parent=11 // pred_region
          _
        $region36: #{actor_forward.1} parent=11 // pred_fallthru
          _
      $region12: #{actor_forward.1} parent=5 // pred_fallthru
        _
      %p235 = scmp.lt.s32.totalorder %s14, 2
      // Predicated region
      $region37: #{actor_forward.1} parent=5 // pred_check
        %p236 = pneg %p235
      $region38: #{actor_forward.1} parent=5 // pred_check_branch
        %238 = sbr.rel (%p236) target = $region40
      $region39: #{actor_forward.1} parent=5 // pred_region
        // Predicated region
        $region41: #{actor_forward.1} parent=39 // pred_check
          %p239 = pneg %p34
        $region42: #{actor_forward.1} parent=39 // pred_check_branch
          %241 = sbr.rel (%p239) target = $region44
        $region43: #{actor_forward.1} parent=39 // pred_region
          %s242 = smul.u32 2, %s14
          %p243 = scmp.lt.s32.totalorder %s242, 3
          %s244 = scalar_select %p243, %s242, 3
          %s245 = smul.addr %s244, 8
          %s246 = scalar_lea.vmem %s0, %s245
          %s247 = smul.u32 2, %s14
        $region44: #{actor_forward.1} parent=39 // pred_fallthru
          _
      $region40: #{actor_forward.1} parent=5 // pred_fallthru
        _
      %p248 = scmp.le.s32.totalorder 1, %s14
      %p249 = scmp.lt.s32.totalorder %s14, 3
      %p250 = pnand %p248, %p249
      %p251 = pneg %p250
      // Predicated region
      $region45: #{actor_forward.1} parent=5 // pred_check
        _
      $region46: #{actor_forward.1} parent=5 // pred_check_branch
        %253 = sbr.rel (%p250) target = $region48
      $region47: #{actor_forward.1} parent=5 // pred_region
        %s254 = ssub.s32 %s14, 1
        // Predicated region
        $region49: #{actor_forward.1} parent=47 // pred_check
          %p255 = pneg %p103
        $region50: #{actor_forward.1} parent=47 // pred_check_branch
          %257 = sbr.rel (%p255) target = $region52
        $region51: #{actor_forward.1} parent=47 // pred_region
          %258 = dma.done [#allocation3], 9600
        $region52: #{actor_forward.1} parent=47 // pred_fallthru
          _
        %s259 = smul.u32 2, %s19
        %p260 = scmp.lt.s32.totalorder %s259, 3
        %s261 = scalar_select %p260, %s259, 3
        %s262 = smul.addr %s261, 8
        %s263 = scalar_lea.vmem %s0, %s262
        %p264 = pneg %p40
        %p265 = pneg %p37
        %p266 = pneg %p61
        %p267 = pneg %p58
        %p268 = pneg %p82
        %p269 = pneg %p79
        %p270 = pneg %p103
        %p271 = pneg %p100
        %p272 = pneg %p124
        %p273 = pneg %p121
        %p274 = pneg %p145
        %p275 = pneg %p142
        %p276 = pneg %p166
        %p277 = pneg %p163
        %p278 = pneg %p192
        %p279 = pneg %p189
        %s280 = smul.u32 2, %s19
        %p281 = scmp.lt.s32.totalorder %s280, 3
        %s282 = scalar_select %p281, %s280, 3
        %s283 = smul.addr %s282, 8
        %s284 = scalar_lea.vmem %s7, %s283
        %s285 = smul.u32 2, %s19
        %p286 = scmp.lt.s32.totalorder %s285, 3
        %s287 = scalar_select %p286, %s285, 3
        %s288 = smul.addr %s287, 8
        %s289 = scalar_lea.vmem %s0, %s288
        %s290 = smul.u32 2, %s19
        %s291 = smul.u32 2, %s19
        %p292 = scmp.lt.s32.totalorder %s291, 3
        %s293 = scalar_select %p292, %s291, 3
        %s294 = smul.addr %s293, 8
        %s295 = scalar_lea.vmem %s7, %s294
        %s296 = smul.u32 2, %s19
        %v298 = vld [vmem:[%s289] sm:$0xff]
        %v299 = vld [vmem:[%s289 + $0x8] sm:$0xff]
        %v300 = vld [vmem:[%s2] sm:$0x77]
        %v301 = vld [vmem:[%s2 + $0x8] sm:$0x77]
        %v302 = vpack.c.bf16 %v299, %v298
        %v303 = vld [vmem:[%s1] sm:$0xff]
        %v304 = vld [vmem:[%s1 + $0x8] sm:$0xff]
        %v305 = vld [vmem:[%s1 + $0x10] sm:$0xff]
        %v306 = vld [vmem:[%s1 + $0x18] sm:$0xff]
        %v307 = vld [vmem:[%s1 + $0x20] sm:$0xff]
        %v308 = vld [vmem:[%s1 + $0x28] sm:$0xff]
        %v309 = vld [vmem:[%s1 + $0x30] sm:$0xff]
        %v310 = vld [vmem:[%s1 + $0x38] sm:$0xff]
        %v313 = vlaneseq
        %v314 = vshrl.u32 %v313, 7
        %v315 = vsub.s32 0, %v314
        %v316 = vrot.slane %v300, %v315
        %v317 = vlaneseq
        %v318 = vshrl.u32 %v317, 7
        %v319 = vsub.s32 4, %v318
        %v320 = vrot.slane %v300, %v319
        %v321 = vlaneseq
        %v322 = vshrl.u32 %v321, 7
        %v323 = vsub.s32 0, %v322
        %v324 = vrot.slane %v301, %v323
        %v325 = vlaneseq
        %v326 = vshrl.u32 %v325, 7
        %v327 = vsub.s32 4, %v326
        %v328 = vrot.slane %v301, %v327
        %v333 = vlaneseq
        %v334 = vshrl.u32 %v333, 7
        %v335 = vsub.s32 0, %v334
        %v336 = vrot.slane %v316, %v335
        %v337 = vlaneseq
        %v338 = vshrl.u32 %v337, 7
        %v339 = vsub.s32 0, %v338
        %v340 = vrot.slane %v320, %v339
        %v341 = vlaneseq
        %v342 = vshrl.u32 %v341, 7
        %v343 = vsub.s32 0, %v342
        %v344 = vrot.slane %v324, %v343
        %v345 = vlaneseq
        %v346 = vshrl.u32 %v345, 7
        %v347 = vsub.s32 0, %v346
        %v348 = vrot.slane %v328, %v347
        %v357 = vunpack.c.l.b16 %v303
        %v358 = vunpack.c.h.b16 %v303
        %v359 = vunpack.c.l.b16 %v304
        %v360 = vunpack.c.h.b16 %v304
        %v361 = vunpack.c.l.b16 %v305
        %v362 = vunpack.c.h.b16 %v305
        %v363 = vunpack.c.l.b16 %v306
        %v364 = vunpack.c.h.b16 %v306
        %v365 = vunpack.c.l.b16 %v307
        %v366 = vunpack.c.h.b16 %v307
        %v367 = vunpack.c.l.b16 %v308
        %v368 = vunpack.c.h.b16 %v308
        %v369 = vunpack.c.l.b16 %v309
        %v370 = vunpack.c.h.b16 %v309
        %v371 = vunpack.c.l.b16 %v310
        %v372 = vunpack.c.h.b16 %v310
        %v373 = vpack.c.b16 %v361, %v357
        %v374 = vpack.c.b16 %v362, %v358
        %v375 = vpack.c.b16 %v363, %v359
        %v376 = vpack.c.b16 %v364, %v360
        %v377 = vpack.c.b16 %v369, %v365
        %v378 = vpack.c.b16 %v370, %v366
        %v379 = vpack.c.b16 %v371, %v367
        %v380 = vpack.c.b16 %v372, %v368
        %vm389 = vcmask 261120
        %v391 = vsel %vm389, %v302, 0
        %393 = vmatprep.subr.bf16.mxu0 %v374
        %394 = vmatpush1.bf16.msra.mxu0 %v373
        %395 = vmatprep.subr.bf16.mxu0 %v378
        %396 = vmatpush1.bf16.msra.mxu0 %v377
        %397 = vmatprep.subr.bf16.mxu0 0
        %398 = vmatpush1.bf16.msra.mxu0 0
        %399 = vmatprep.subr.bf16.mxu0 0
        %400 = vmatpush1.bf16.msra.mxu0 0
        %401 = vmatprep.subr.bf16.mxu0 0
        %402 = vmatpush1.bf16.msra.mxu0 0
        %403 = vmatprep.subr.bf16.mxu0 0
        %404 = vmatpush1.bf16.msra.mxu0 0
        %405 = vmatprep.subr.bf16.mxu0 0
        %406 = vmatpush1.bf16.msra.mxu0 0
        %407 = vmatprep.subr.bf16.mxu0 0
        %408 = vmatpush1.bf16.msra.mxu0 0
        %409 = vmatprep.subr.bf16.mxu0 0
        %410 = vmatpush1.bf16.msra.mxu0 0
        %411 = vmatprep.subr.bf16.mxu0 0
        %412 = vmatpush1.bf16.msra.mxu0 0
        %413 = vmatprep.subr.bf16.mxu0 0
        %414 = vmatpush1.bf16.msra.mxu0 0
        %415 = vmatprep.subr.bf16.mxu0 0
        %416 = vmatpush1.bf16.msra.mxu0 0
        %417 = vmatprep.subr.bf16.mxu0 0
        %418 = vmatpush1.bf16.msra.mxu0 0
        %419 = vmatprep.subr.bf16.mxu0 0
        %420 = vmatpush1.bf16.msra.mxu0 0
        %421 = vmatprep.subr.bf16.mxu0 0
        %422 = vmatpush1.bf16.msra.mxu0 0
        %423 = vmatprep.subr.bf16.mxu0 0
        %424 = vmatpush1.bf16.msra.mxu0 0
        %425 = vmatprep.mubr.bf16.mxu0 0
        %426 = vmatmul.mubr.bf16.gmra.mrb[0].mxu0 %v391
        %v427 = vpop.f32.mrb[0].mxu0
        %v428 = vadd.f32 %v336, %v427
        %v429 = vpop.f32.mrb[0].mxu0
        %v430 = vadd.f32 %v340, %v429
        %v431 = vpop.f32.mrb[0].mxu0
        %v432 = vadd.f32 %v336, %v431
        %v433 = vpop.f32.mrb[0].mxu0
        %v434 = vadd.f32 %v340, %v433
        %435 = vdwg.mxu0
        %436 = vmatprep.subr.bf16.mxu0 %v376
        %437 = vmatpush1.bf16.msra.mxu0 %v375
        %438 = vmatprep.subr.bf16.mxu0 %v380
        %439 = vmatpush1.bf16.msra.mxu0 %v379
        %440 = vmatprep.subr.bf16.mxu0 0
        %441 = vmatpush1.bf16.msra.mxu0 0
        %442 = vmatprep.subr.bf16.mxu0 0
        %443 = vmatpush1.bf16.msra.mxu0 0
        %444 = vmatprep.subr.bf16.mxu0 0
        %445 = vmatpush1.bf16.msra.mxu0 0
        %446 = vmatprep.subr.bf16.mxu0 0
        %447 = vmatpush1.bf16.msra.mxu0 0
        %448 = vmatprep.subr.bf16.mxu0 0
        %449 = vmatpush1.bf16.msra.mxu0 0
        %450 = vmatprep.subr.bf16.mxu0 0
        %451 = vmatpush1.bf16.msra.mxu0 0
        %452 = vmatprep.subr.bf16.mxu0 0
        %453 = vmatpush1.bf16.msra.mxu0 0
        %454 = vmatprep.subr.bf16.mxu0 0
        %455 = vmatpush1.bf16.msra.mxu0 0
        %456 = vmatprep.subr.bf16.mxu0 0
        %457 = vmatpush1.bf16.msra.mxu0 0
        %458 = vmatprep.subr.bf16.mxu0 0
        %459 = vmatpush1.bf16.msra.mxu0 0
        %460 = vmatprep.subr.bf16.mxu0 0
        %461 = vmatpush1.bf16.msra.mxu0 0
        %462 = vmatprep.subr.bf16.mxu0 0
        %463 = vmatpush1.bf16.msra.mxu0 0
        %464 = vmatprep.subr.bf16.mxu0 0
        %465 = vmatpush1.bf16.msra.mxu0 0
        %466 = vmatprep.subr.bf16.mxu0 0
        %467 = vmatpush1.bf16.msra.mxu0 0
        %468 = vmatprep.mubr.bf16.mxu0 0
        %469 = vmatmul.mubr.bf16.gmra.mrb[0].mxu0 %v391
        %v470 = vpop.f32.mrb[0].mxu0
        %v471 = vadd.f32 %v344, %v470
        %v472 = vpop.f32.mrb[0].mxu0
        %v473 = vadd.f32 %v348, %v472
        %v474 = vpop.f32.mrb[0].mxu0
        %v475 = vadd.f32 %v344, %v474
        %v476 = vpop.f32.mrb[0].mxu0
        %v477 = vadd.f32 %v348, %v476
        %478 = vdwg.mxu0
        %v479 = vadd.f32 %v428, %v430
        %v480 = vadd.f32 %v479, %v471
        %vm481 = vcmask 130048
        %v482 = vsel %vm481, %v473, 0.0
        %v483 = vadd.f32 %v480, %v482
        %484 = vadd.xlane.f32.xlu0 %v483
        %v485 = vpop.xlane.xlu0 %484
        %v486 = vadd.f32 %v432, %v434
        %v487 = vadd.f32 %v486, %v475
        %v488 = vsel %vm481, %v477, 0.0
        %v489 = vadd.f32 %v487, %v488
        %490 = vadd.xlane.f32.xlu0 %v489
        %v491 = vpop.xlane.xlu0 %490
        %v492 = vmul.f32 %v428, %v428
        %v493 = vmul.f32 %v430, %v430
        %v494 = vmul.f32 %v471, %v471
        %v495 = vmul.f32 %v473, %v473
        %v496 = vmul.f32 %v432, %v432
        %v497 = vmul.f32 %v434, %v434
        %v498 = vmul.f32 %v475, %v475
        %v499 = vmul.f32 %v477, %v477
        %v500 = vadd.f32 %v492, %v493
        %v501 = vadd.f32 %v500, %v494
        %v502 = vsel %vm481, %v495, 0.0
        %v503 = vadd.f32 %v501, %v502
        %504 = vadd.xlane.f32.xlu0 %v503
        %v505 = vpop.xlane.xlu0 %504
        %v506 = vadd.f32 %v496, %v497
        %v507 = vadd.f32 %v506, %v498
        %v508 = vsel %vm481, %v499, 0.0
        %v509 = vadd.f32 %v507, %v508
        %510 = vadd.xlane.f32.xlu0 %v509
        %v511 = vpop.xlane.xlu0 %510
        %v512 = vmul.f32 %v485, 0.0025
        %v513 = vmul.f32 %v491, 0.0025
        %v514 = vmul.f32 %v505, 0.0025
        %v515 = vmul.f32 %v511, 0.0025
        %v516 = vmul.f32 %v512, %v512
        %v517 = vmul.f32 %v513, %v513
        %v518 = vsub.f32 %v514, %v516
        %v519 = vsub.f32 %v515, %v517
        %v520 = vmax.f32 %v518, 0.0
        %v521 = vmax.f32 %v519, 0.0
        %v522 = vsub.f32 %v428, %v512
        %v523 = vsub.f32 %v430, %v512
        %v524 = vsub.f32 %v471, %v512
        %v525 = vsub.f32 %v473, %v512
        %v526 = vsub.f32 %v432, %v513
        %v527 = vsub.f32 %v434, %v513
        %v528 = vsub.f32 %v475, %v513
        %v529 = vsub.f32 %v477, %v513
        %v530 = vadd.f32 %v520, 1e-05
        %v531 = vadd.f32 %v521, 1e-05
        %v532 = vrsqrt.pop %v530
        %v533 = vrsqrt.pop %v531
        %v534 = vmul.f32 %v522, %v532
        %v535 = vmul.f32 %v523, %v532
        %v536 = vmul.f32 %v524, %v532
        %v537 = vmul.f32 %v525, %v532
        %v538 = vmul.f32 %v526, %v533
        %v539 = vmul.f32 %v527, %v533
        %v540 = vmul.f32 %v528, %v533
        %v541 = vmul.f32 %v529, %v533
        %v542 = vlaneseq
        %v543 = vshrl.u32 %v542, 7
        %v544 = vsub.s32 1, %v543
        %v545 = vrot.slane %v300, %v544
        %v546 = vlaneseq
        %v547 = vshrl.u32 %v546, 7
        %v548 = vsub.s32 5, %v547
        %v549 = vrot.slane %v300, %v548
        %v550 = vlaneseq
        %v551 = vshrl.u32 %v550, 7
        %v552 = vsub.s32 1, %v551
        %v553 = vrot.slane %v301, %v552
        %v554 = vlaneseq
        %v555 = vshrl.u32 %v554, 7
        %v556 = vsub.s32 5, %v555
        %v557 = vrot.slane %v301, %v556
        %v562 = vlaneseq
        %v563 = vshrl.u32 %v562, 7
        %v564 = vsub.s32 1, %v563
        %v565 = vrot.slane %v545, %v564
        %v566 = vlaneseq
        %v567 = vshrl.u32 %v566, 7
        %v568 = vsub.s32 1, %v567
        %v569 = vrot.slane %v549, %v568
        %v570 = vlaneseq
        %v571 = vshrl.u32 %v570, 7
        %v572 = vsub.s32 1, %v571
        %v573 = vrot.slane %v553, %v572
        %v574 = vlaneseq
        %v575 = vshrl.u32 %v574, 7
        %v576 = vsub.s32 1, %v575
        %v577 = vrot.slane %v557, %v576
        %v578 = vmul.f32 %v534, %v565
        %v579 = vmul.f32 %v535, %v569
        %v580 = vmul.f32 %v536, %v573
        %v581 = vmul.f32 %v537, %v577
        %v582 = vmul.f32 %v538, %v565
        %v583 = vmul.f32 %v539, %v569
        %v584 = vmul.f32 %v540, %v573
        %v585 = vmul.f32 %v541, %v577
        %v586 = vlaneseq
        %v587 = vshrl.u32 %v586, 7
        %v588 = vsub.s32 2, %v587
        %v589 = vrot.slane %v300, %v588
        %v590 = vlaneseq
        %v591 = vshrl.u32 %v590, 7
        %v592 = vsub.s32 6, %v591
        %v593 = vrot.slane %v300, %v592
        %v594 = vlaneseq
        %v595 = vshrl.u32 %v594, 7
        %v596 = vsub.s32 2, %v595
        %v597 = vrot.slane %v301, %v596
        %v598 = vlaneseq
        %v599 = vshrl.u32 %v598, 7
        %v600 = vsub.s32 6, %v599
        %v601 = vrot.slane %v301, %v600
        %v606 = vlaneseq
        %v607 = vshrl.u32 %v606, 7
        %v608 = vsub.s32 2, %v607
        %v609 = vrot.slane %v589, %v608
        %v610 = vlaneseq
        %v611 = vshrl.u32 %v610, 7
        %v612 = vsub.s32 2, %v611
        %v613 = vrot.slane %v593, %v612
        %v614 = vlaneseq
        %v615 = vshrl.u32 %v614, 7
        %v616 = vsub.s32 2, %v615
        %v617 = vrot.slane %v597, %v616
        %v618 = vlaneseq
        %v619 = vshrl.u32 %v618, 7
        %v620 = vsub.s32 2, %v619
        %v621 = vrot.slane %v601, %v620
        %v622 = vadd.f32 %v578, %v609
        %v623 = vadd.f32 %v579, %v613
        %v624 = vadd.f32 %v580, %v617
        %v625 = vadd.f32 %v581, %v621
        %v626 = vadd.f32 %v582, %v609
        %v627 = vadd.f32 %v583, %v613
        %v628 = vadd.f32 %v584, %v617
        %v629 = vadd.f32 %v585, %v621
        %v630 = vmax.f32 %v622, 0.0
        %v631 = vmax.f32 %v623, 0.0
        %v632 = vmax.f32 %v624, 0.0
        %v633 = vmax.f32 %v625, 0.0
        %v634 = vmax.f32 %v626, 0.0
        %v635 = vmax.f32 %v627, 0.0
        %v636 = vmax.f32 %v628, 0.0
        %v637 = vmax.f32 %v629, 0.0
        %v638 = vld [vmem:[%s4] sm:$0x77]
        %v639 = vld [vmem:[%s4 + $0x8] sm:$0x7]
        %v640 = vpack.c.bf16 %v634, %v630
        %v641 = vpack.c.bf16 %v635, %v631
        %v642 = vpack.c.bf16 %v636, %v632
        %v643 = vpack.c.bf16 %v637, %v633
        %v644 = vld [vmem:[#allocation2] sm:$0xff]
        %v645 = vld [vmem:[#allocation2 + $0x8] sm:$0xf]
        %v646 = vld [vmem:[#allocation2 + $0xc] sm:$0xff]
        %v647 = vld [vmem:[#allocation2 + $0x14] sm:$0xf]
        %v648 = vld [vmem:[#allocation2 + $0x18] sm:$0xff]
        %v649 = vld [vmem:[#allocation2 + $0x20] sm:$0xf]
        %v650 = vld [vmem:[#allocation2 + $0x24] sm:$0xff]
        %v651 = vld [vmem:[#allocation2 + $0x2c] sm:$0xf]
        %v652 = vld [vmem:[#allocation2 + $0x30] sm:$0xff]
        %v653 = vld [vmem:[#allocation2 + $0x38] sm:$0xf]
        %v654 = vld [vmem:[#allocation2 + $0x3c] sm:$0xff]
        %v655 = vld [vmem:[#allocation2 + $0x44] sm:$0xf]
        %v656 = vld [vmem:[#allocation2 + $0x48] sm:$0xff]
        %v657 = vld [vmem:[#allocation2 + $0x50] sm:$0xf]
        %v658 = vld [vmem:[#allocation2 + $0x54] sm:$0xff]
        %v659 = vld [vmem:[#allocation2 + $0x5c] sm:$0xf]
        %v660 = vld [vmem:[#allocation2 + $0x60] sm:$0xff]
        %v661 = vld [vmem:[#allocation2 + $0x68] sm:$0xf]
        %v662 = vld [vmem:[#allocation2 + $0x6c] sm:$0xff]
        %v663 = vld [vmem:[#allocation2 + $0x74] sm:$0xf]
        %v664 = vld [vmem:[#allocation2 + $0x78] sm:$0xff]
        %v665 = vld [vmem:[#allocation2 + $0x80] sm:$0xf]
        %v666 = vld [vmem:[#allocation2 + $0x84] sm:$0xff]
        %v667 = vld [vmem:[#allocation2 + $0x8c] sm:$0xf]
        %v668 = vld [vmem:[#allocation2 + $0x90] sm:$0xff]
        %v669 = vld [vmem:[#allocation2 + $0x98] sm:$0xf]
        %v670 = vld [vmem:[#allocation2 + $0x9c] sm:$0xff]
        %v671 = vld [vmem:[#allocation2 + $0xa4] sm:$0xf]
        %v672 = vld [vmem:[#allocation2 + $0xa8] sm:$0xff]
        %v673 = vld [vmem:[#allocation2 + $0xb0] sm:$0xf]
        %v674 = vld [vmem:[#allocation2 + $0xb4] sm:$0xff]
        %v675 = vld [vmem:[#allocation2 + $0xbc] sm:$0xf]
        %v676 = vld [vmem:[#allocation2 + $0xc0] sm:$0xff]
        %v677 = vld [vmem:[#allocation2 + $0xc8] sm:$0xf]
        %v678 = vld [vmem:[#allocation2 + $0xcc] sm:$0xff]
        %v679 = vld [vmem:[#allocation2 + $0xd4] sm:$0xf]
        %v680 = vld [vmem:[#allocation2 + $0xd8] sm:$0xff]
        %v681 = vld [vmem:[#allocation2 + $0xe0] sm:$0xf]
        %v682 = vld [vmem:[#allocation2 + $0xe4] sm:$0xff]
        %v683 = vld [vmem:[#allocation2 + $0xec] sm:$0xf]
        %v684 = vld [vmem:[#allocation2 + $0xf0] sm:$0xff]
        %v685 = vld [vmem:[#allocation2 + $0xf8] sm:$0xf]
        %v686 = vld [vmem:[#allocation2 + $0xfc] sm:$0xff]
        %v687 = vld [vmem:[#allocation2 + $0x104] sm:$0xf]
        %v688 = vld [vmem:[#allocation2 + $0x108] sm:$0xff]
        %v689 = vld [vmem:[#allocation2 + $0x110] sm:$0xf]
        %v690 = vld [vmem:[#allocation2 + $0x114] sm:$0xff]
        %v691 = vld [vmem:[#allocation2 + $0x11c] sm:$0xf]
        %v692 = vld [vmem:[#allocation2 + $0x120] sm:$0xff]
        %v693 = vld [vmem:[#allocation2 + $0x128] sm:$0xf]
        %v694 = vld [vmem:[#allocation2 + $0x12c] sm:$0xff]
        %v695 = vld [vmem:[#allocation2 + $0x134] sm:$0xf]
        %v696 = vld [vmem:[#allocation2 + $0x138] sm:$0xff]
        %v697 = vld [vmem:[#allocation2 + $0x140] sm:$0xf]
        %v698 = vld [vmem:[#allocation2 + $0x144] sm:$0xff]
        %v699 = vld [vmem:[#allocation2 + $0x14c] sm:$0xf]
        %v700 = vld [vmem:[#allocation2 + $0x150] sm:$0xff]
        %v701 = vld [vmem:[#allocation2 + $0x158] sm:$0xf]
        %v702 = vld [vmem:[#allocation2 + $0x15c] sm:$0xff]
        %v703 = vld [vmem:[#allocation2 + $0x164] sm:$0xf]
        %v704 = vld [vmem:[#allocation2 + $0x168] sm:$0xff]
        %v705 = vld [vmem:[#allocation2 + $0x170] sm:$0xf]
        %v706 = vld [vmem:[#allocation2 + $0x174] sm:$0xff]
        %v707 = vld [vmem:[#allocation2 + $0x17c] sm:$0xf]
        %v708 = vld [vmem:[#allocation2 + $0x180] sm:$0xff]
        %v709 = vld [vmem:[#allocation2 + $0x188] sm:$0xf]
        %v710 = vld [vmem:[#allocation2 + $0x18c] sm:$0xff]
        %v711 = vld [vmem:[#allocation2 + $0x194] sm:$0xf]
        %v712 = vld [vmem:[#allocation2 + $0x198] sm:$0xff]
        %v713 = vld [vmem:[#allocation2 + $0x1a0] sm:$0xf]
        %v714 = vld [vmem:[#allocation2 + $0x1a4] sm:$0xff]
        %v715 = vld [vmem:[#allocation2 + $0x1ac] sm:$0xf]
        %v716 = vld [vmem:[#allocation2 + $0x1b0] sm:$0xff]
        %v717 = vld [vmem:[#allocation2 + $0x1b8] sm:$0xf]
        %v718 = vld [vmem:[#allocation2 + $0x1bc] sm:$0xff]
        %v719 = vld [vmem:[#allocation2 + $0x1c4] sm:$0xf]
        %v720 = vld [vmem:[#allocation2 + $0x1c8] sm:$0xff]
        %v721 = vld [vmem:[#allocation2 + $0x1d0] sm:$0xf]
        %v722 = vld [vmem:[#allocation2 + $0x1d4] sm:$0xff]
        %v723 = vld [vmem:[#allocation2 + $0x1dc] sm:$0xf]
        %v724 = vld [vmem:[#allocation2 + $0x1e0] sm:$0xff]
        %v725 = vld [vmem:[#allocation2 + $0x1e8] sm:$0xf]
        %v726 = vld [vmem:[#allocation2 + $0x1ec] sm:$0xff]
        %v727 = vld [vmem:[#allocation2 + $0x1f4] sm:$0xf]
        %v728 = vld [vmem:[#allocation2 + $0x1f8] sm:$0xff]
        %v729 = vld [vmem:[#allocation2 + $0x200] sm:$0xf]
        %v730 = vld [vmem:[#allocation2 + $0x204] sm:$0xff]
        %v731 = vld [vmem:[#allocation2 + $0x20c] sm:$0xf]
        %v732 = vld [vmem:[#allocation2 + $0x210] sm:$0xff]
        %v733 = vld [vmem:[#allocation2 + $0x218] sm:$0xf]
        %v734 = vld [vmem:[#allocation2 + $0x21c] sm:$0xff]
        %v735 = vld [vmem:[#allocation2 + $0x224] sm:$0xf]
        %v736 = vld [vmem:[#allocation2 + $0x228] sm:$0xff]
        %v737 = vld [vmem:[#allocation2 + $0x230] sm:$0xf]
        %v738 = vld [vmem:[#allocation2 + $0x234] sm:$0xff]
        %v739 = vld [vmem:[#allocation2 + $0x23c] sm:$0xf]
        %v740 = vld [vmem:[#allocation2 + $0x240] sm:$0xff]
        %v741 = vld [vmem:[#allocation2 + $0x248] sm:$0xf]
        %v742 = vld [vmem:[#allocation2 + $0x24c] sm:$0xff]
        %v743 = vld [vmem:[#allocation2 + $0x254] sm:$0xf]
        %v746 = vlaneseq
        %v747 = vshrl.u32 %v746, 7
        %v748 = vsub.s32 0, %v747
        %v749 = vrot.slane %v638, %v748
        %v750 = vlaneseq
        %v751 = vshrl.u32 %v750, 7
        %v752 = vsub.s32 4, %v751
        %v753 = vrot.slane %v638, %v752
        %v754 = vlaneseq
        %v755 = vshrl.u32 %v754, 7
        %v756 = vsub.s32 0, %v755
        %v757 = vrot.slane %v639, %v756
        %v761 = vlaneseq
        %v762 = vshrl.u32 %v761, 7
        %v763 = vsub.s32 0, %v762
        %v764 = vrot.slane %v749, %v763
        %v765 = vlaneseq
        %v766 = vshrl.u32 %v765, 7
        %v767 = vsub.s32 0, %v766
        %v768 = vrot.slane %v753, %v767
        %v769 = vlaneseq
        %v770 = vshrl.u32 %v769, 7
        %v771 = vsub.s32 0, %v770
        %v772 = vrot.slane %v757, %v771
        %v873 = vunpack.c.l.b16 %v644
        %v874 = vunpack.c.h.b16 %v644
        %v875 = vunpack.c.l.b16 %v645
        %v876 = vunpack.c.l.b16 %v646
        %v877 = vunpack.c.h.b16 %v646
        %v878 = vunpack.c.l.b16 %v647
        %v879 = vunpack.c.l.b16 %v648
        %v880 = vunpack.c.h.b16 %v648
        %v881 = vunpack.c.l.b16 %v649
        %v882 = vunpack.c.l.b16 %v650
        %v883 = vunpack.c.h.b16 %v650
        %v884 = vunpack.c.l.b16 %v651
        %v885 = vunpack.c.l.b16 %v652
        %v886 = vunpack.c.h.b16 %v652
        %v887 = vunpack.c.l.b16 %v653
        %v888 = vunpack.c.l.b16 %v654
        %v889 = vunpack.c.h.b16 %v654
        %v890 = vunpack.c.l.b16 %v655
        %v891 = vunpack.c.l.b16 %v656
        %v892 = vunpack.c.h.b16 %v656
        %v893 = vunpack.c.l.b16 %v657
        %v894 = vunpack.c.l.b16 %v658
        %v895 = vunpack.c.h.b16 %v658
        %v896 = vunpack.c.l.b16 %v659
        %v897 = vunpack.c.l.b16 %v660
        %v898 = vunpack.c.h.b16 %v660
        %v899 = vunpack.c.l.b16 %v661
        %v900 = vunpack.c.l.b16 %v662
        %v901 = vunpack.c.h.b16 %v662
        %v902 = vunpack.c.l.b16 %v663
        %v903 = vunpack.c.l.b16 %v664
        %v904 = vunpack.c.h.b16 %v664
        %v905 = vunpack.c.l.b16 %v665
        %v906 = vunpack.c.l.b16 %v666
        %v907 = vunpack.c.h.b16 %v666
        %v908 = vunpack.c.l.b16 %v667
        %v909 = vunpack.c.l.b16 %v668
        %v910 = vunpack.c.h.b16 %v668
        %v911 = vunpack.c.l.b16 %v669
        %v912 = vunpack.c.l.b16 %v670
        %v913 = vunpack.c.h.b16 %v670
        %v914 = vunpack.c.l.b16 %v671
        %v915 = vunpack.c.l.b16 %v672
        %v916 = vunpack.c.h.b16 %v672
        %v917 = vunpack.c.l.b16 %v673
        %v918 = vunpack.c.l.b16 %v674
        %v919 = vunpack.c.h.b16 %v674
        %v920 = vunpack.c.l.b16 %v675
        %v921 = vunpack.c.l.b16 %v676
        %v922 = vunpack.c.h.b16 %v676
        %v923 = vunpack.c.l.b16 %v677
        %v924 = vunpack.c.l.b16 %v678
        %v925 = vunpack.c.h.b16 %v678
        %v926 = vunpack.c.l.b16 %v679
        %v927 = vunpack.c.l.b16 %v680
        %v928 = vunpack.c.h.b16 %v680
        %v929 = vunpack.c.l.b16 %v681
        %v930 = vunpack.c.l.b16 %v682
        %v931 = vunpack.c.h.b16 %v682
        %v932 = vunpack.c.l.b16 %v683
        %v933 = vunpack.c.l.b16 %v684
        %v934 = vunpack.c.h.b16 %v684
        %v935 = vunpack.c.l.b16 %v685
        %v936 = vunpack.c.l.b16 %v686
        %v937 = vunpack.c.h.b16 %v686
        %v938 = vunpack.c.l.b16 %v687
        %v939 = vunpack.c.l.b16 %v688
        %v940 = vunpack.c.h.b16 %v688
        %v941 = vunpack.c.l.b16 %v689
        %v942 = vunpack.c.l.b16 %v690
        %v943 = vunpack.c.h.b16 %v690
        %v944 = vunpack.c.l.b16 %v691
        %v945 = vunpack.c.l.b16 %v692
        %v946 = vunpack.c.h.b16 %v692
        %v947 = vunpack.c.l.b16 %v693
        %v948 = vunpack.c.l.b16 %v694
        %v949 = vunpack.c.h.b16 %v694
        %v950 = vunpack.c.l.b16 %v695
        %v951 = vunpack.c.l.b16 %v696
        %v952 = vunpack.c.h.b16 %v696
        %v953 = vunpack.c.l.b16 %v697
        %v954 = vunpack.c.l.b16 %v698
        %v955 = vunpack.c.h.b16 %v698
        %v956 = vunpack.c.l.b16 %v699
        %v957 = vunpack.c.l.b16 %v700
        %v958 = vunpack.c.h.b16 %v700
        %v959 = vunpack.c.l.b16 %v701
        %v960 = vunpack.c.l.b16 %v702
        %v961 = vunpack.c.h.b16 %v702
        %v962 = vunpack.c.l.b16 %v703
        %v963 = vunpack.c.l.b16 %v704
        %v964 = vunpack.c.h.b16 %v704
        %v965 = vunpack.c.l.b16 %v705
        %v966 = vunpack.c.l.b16 %v706
        %v967 = vunpack.c.h.b16 %v706
        %v968 = vunpack.c.l.b16 %v707
        %v969 = vunpack.c.l.b16 %v708
        %v970 = vunpack.c.h.b16 %v708
        %v971 = vunpack.c.l.b16 %v709
        %v972 = vunpack.c.l.b16 %v710
        %v973 = vunpack.c.h.b16 %v710
        %v974 = vunpack.c.l.b16 %v711
        %v975 = vunpack.c.l.b16 %v712
        %v976 = vunpack.c.h.b16 %v712
        %v977 = vunpack.c.l.b16 %v713
        %v978 = vunpack.c.l.b16 %v714
        %v979 = vunpack.c.h.b16 %v714
        %v980 = vunpack.c.l.b16 %v715
        %v981 = vunpack.c.l.b16 %v716
        %v982 = vunpack.c.h.b16 %v716
        %v983 = vunpack.c.l.b16 %v717
        %v984 = vunpack.c.l.b16 %v718
        %v985 = vunpack.c.h.b16 %v718
        %v986 = vunpack.c.l.b16 %v719
        %v987 = vunpack.c.l.b16 %v720
        %v988 = vunpack.c.h.b16 %v720
        %v989 = vunpack.c.l.b16 %v721
        %v990 = vunpack.c.l.b16 %v722
        %v991 = vunpack.c.h.b16 %v722
        %v992 = vunpack.c.l.b16 %v723
        %v993 = vunpack.c.l.b16 %v724
        %v994 = vunpack.c.h.b16 %v724
        %v995 = vunpack.c.l.b16 %v725
        %v996 = vunpack.c.l.b16 %v726
        %v997 = vunpack.c.h.b16 %v726
        %v998 = vunpack.c.l.b16 %v727
        %v999 = vunpack.c.l.b16 %v728
        %v1000 = vunpack.c.h.b16 %v728
        %v1001 = vunpack.c.l.b16 %v729
        %v1002 = vunpack.c.l.b16 %v730
        %v1003 = vunpack.c.h.b16 %v730
        %v1004 = vunpack.c.l.b16 %v731
        %v1005 = vunpack.c.l.b16 %v732
        %v1006 = vunpack.c.h.b16 %v732
        %v1007 = vunpack.c.l.b16 %v733
        %v1008 = vunpack.c.l.b16 %v734
        %v1009 = vunpack.c.h.b16 %v734
        %v1010 = vunpack.c.l.b16 %v735
        %v1011 = vunpack.c.l.b16 %v736
        %v1012 = vunpack.c.h.b16 %v736
        %v1013 = vunpack.c.l.b16 %v737
        %v1014 = vunpack.c.l.b16 %v738
        %v1015 = vunpack.c.h.b16 %v738
        %v1016 = vunpack.c.l.b16 %v739
        %v1017 = vunpack.c.l.b16 %v740
        %v1018 = vunpack.c.h.b16 %v740
        %v1019 = vunpack.c.l.b16 %v741
        %v1020 = vunpack.c.l.b16 %v742
        %v1021 = vunpack.c.h.b16 %v742
        %v1022 = vunpack.c.l.b16 %v743
        %v1023 = vpack.c.b16 %v876, %v873
        %v1024 = vpack.c.b16 %v877, %v874
        %v1025 = vpack.c.b16 %v878, %v875
        %v1026 = vpack.c.b16 %v882, %v879
        %v1027 = vpack.c.b16 %v883, %v880
        %v1028 = vpack.c.b16 %v884, %v881
        %v1029 = vpack.c.b16 %v888, %v885
        %v1030 = vpack.c.b16 %v889, %v886
        %v1031 = vpack.c.b16 %v890, %v887
        %v1032 = vpack.c.b16 %v894, %v891
        %v1033 = vpack.c.b16 %v895, %v892
        %v1034 = vpack.c.b16 %v896, %v893
        %v1035 = vpack.c.b16 %v900, %v897
        %v1036 = vpack.c.b16 %v901, %v898
        %v1037 = vpack.c.b16 %v902, %v899
        %v1038 = vpack.c.b16 %v906, %v903
        %v1039 = vpack.c.b16 %v907, %v904
        %v1040 = vpack.c.b16 %v908, %v905
        %v1041 = vpack.c.b16 %v912, %v909
        %v1042 = vpack.c.b16 %v913, %v910
        %v1043 = vpack.c.b16 %v914, %v911
        %v1044 = vpack.c.b16 %v918, %v915
        %v1045 = vpack.c.b16 %v919, %v916
        %v1046 = vpack.c.b16 %v920, %v917
        %v1047 = vpack.c.b16 %v924, %v921
        %v1048 = vpack.c.b16 %v925, %v922
        %v1049 = vpack.c.b16 %v926, %v923
        %v1050 = vpack.c.b16 %v930, %v927
        %v1051 = vpack.c.b16 %v931, %v928
        %v1052 = vpack.c.b16 %v932, %v929
        %v1053 = vpack.c.b16 %v936, %v933
        %v1054 = vpack.c.b16 %v937, %v934
        %v1055 = vpack.c.b16 %v938, %v935
        %v1056 = vpack.c.b16 %v942, %v939
        %v1057 = vpack.c.b16 %v943, %v940
        %v1058 = vpack.c.b16 %v944, %v941
        %v1059 = vpack.c.b16 %v948, %v945
        %v1060 = vpack.c.b16 %v949, %v946
        %v1061 = vpack.c.b16 %v950, %v947
        %v1062 = vpack.c.b16 %v954, %v951
        %v1063 = vpack.c.b16 %v955, %v952
        %v1064 = vpack.c.b16 %v956, %v953
        %v1065 = vpack.c.b16 %v960, %v957
        %v1066 = vpack.c.b16 %v961, %v958
        %v1067 = vpack.c.b16 %v962, %v959
        %v1068 = vpack.c.b16 %v966, %v963
        %v1069 = vpack.c.b16 %v967, %v964
        %v1070 = vpack.c.b16 %v968, %v965
        %v1071 = vpack.c.b16 %v972, %v969
        %v1072 = vpack.c.b16 %v973, %v970
        %v1073 = vpack.c.b16 %v974, %v971
        %v1074 = vpack.c.b16 %v978, %v975
        %v1075 = vpack.c.b16 %v979, %v976
        %v1076 = vpack.c.b16 %v980, %v977
        %v1077 = vpack.c.b16 %v984, %v981
        %v1078 = vpack.c.b16 %v985, %v982
        %v1079 = vpack.c.b16 %v986, %v983
        %v1080 = vpack.c.b16 %v990, %v987
        %v1081 = vpack.c.b16 %v991, %v988
        %v1082 = vpack.c.b16 %v992, %v989
        %v1083 = vpack.c.b16 %v996, %v993
        %v1084 = vpack.c.b16 %v997, %v994
        %v1085 = vpack.c.b16 %v998, %v995
        %v1086 = vpack.c.b16 %v1002, %v999
        %v1087 = vpack.c.b16 %v1003, %v1000
        %v1088 = vpack.c.b16 %v1004, %v1001
        %v1089 = vpack.c.b16 %v1008, %v1005
        %v1090 = vpack.c.b16 %v1009, %v1006
        %v1091 = vpack.c.b16 %v1010, %v1007
        %v1092 = vpack.c.b16 %v1014, %v1011
        %v1093 = vpack.c.b16 %v1015, %v1012
        %v1094 = vpack.c.b16 %v1016, %v1013
        %v1095 = vpack.c.b16 %v1020, %v1017
        %v1096 = vpack.c.b16 %v1021, %v1018
        %v1097 = vpack.c.b16 %v1022, %v1019
        %v1174 = vsel %vm481, %v643, 0
        %1176 = vmatprep.subr.bf16.mxu0 %v1024
        %1177 = vmatpush1.bf16.msra.mxu0 %v1023
        %1178 = vmatprep.subr.bf16.mxu0 %v1027
        %1179 = vmatpush1.bf16.msra.mxu0 %v1026
        %1180 = vmatprep.subr.bf16.mxu0 %v1030
        %1181 = vmatpush1.bf16.msra.mxu0 %v1029
        %1182 = vmatprep.subr.bf16.mxu0 %v1033
        %1183 = vmatpush1.bf16.msra.mxu0 %v1032
        %1184 = vmatprep.subr.bf16.mxu0 %v1036
        %1185 = vmatpush1.bf16.msra.mxu0 %v1035
        %1186 = vmatprep.subr.bf16.mxu0 %v1039
        %1187 = vmatpush1.bf16.msra.mxu0 %v1038
        %1188 = vmatprep.subr.bf16.mxu0 %v1042
        %1189 = vmatpush1.bf16.msra.mxu0 %v1041
        %1190 = vmatprep.subr.bf16.mxu0 %v1045
        %1191 = vmatpush1.bf16.msra.mxu0 %v1044
        %1192 = vmatprep.subr.bf16.mxu0 %v1048
        %1193 = vmatpush1.bf16.msra.mxu0 %v1047
        %1194 = vmatprep.subr.bf16.mxu0 %v1051
        %1195 = vmatpush1.bf16.msra.mxu0 %v1050
        %1196 = vmatprep.subr.bf16.mxu0 %v1054
        %1197 = vmatpush1.bf16.msra.mxu0 %v1053
        %1198 = vmatprep.subr.bf16.mxu0 %v1057
        %1199 = vmatpush1.bf16.msra.mxu0 %v1056
        %1200 = vmatprep.subr.bf16.mxu0 %v1060
        %1201 = vmatpush1.bf16.msra.mxu0 %v1059
        %1202 = vmatprep.subr.bf16.mxu0 %v1063
        %1203 = vmatpush1.bf16.msra.mxu0 %v1062
        %1204 = vmatprep.subr.bf16.mxu0 %v1066
        %1205 = vmatpush1.bf16.msra.mxu0 %v1065
        %1206 = vmatprep.subr.bf16.mxu0 %v1069
        %1207 = vmatpush1.bf16.msra.mxu0 %v1068
        %1208 = vmatprep.mubr.bf16.mxu0 %v641
        %1209 = vmatmul.mubr.bf16.gmra.mrb[0].mxu0 %v640
        %v1210 = vpop.f32.mrb[0].mxu0
        %v1211 = vadd.f32 %v764, %v1210
        %v1212 = vpop.f32.mrb[0].mxu0
        %v1213 = vadd.f32 %v768, %v1212
        %v1214 = vpop.f32.mrb[0].mxu0
        %v1215 = vadd.f32 %v764, %v1214
        %v1216 = vpop.f32.mrb[0].mxu0
        %v1217 = vadd.f32 %v768, %v1216
        %1218 = vdwg.mxu0
        %1219 = vmatprep.subr.bf16.mxu0 %v1072
        %1220 = vmatpush1.bf16.msra.mxu0 %v1071
        %1221 = vmatprep.subr.bf16.mxu0 %v1075
        %1222 = vmatpush1.bf16.msra.mxu0 %v1074
        %1223 = vmatprep.subr.bf16.mxu0 %v1078
        %1224 = vmatpush1.bf16.msra.mxu0 %v1077
        %1225 = vmatprep.subr.bf16.mxu0 %v1081
        %1226 = vmatpush1.bf16.msra.mxu0 %v1080
        %1227 = vmatprep.subr.bf16.mxu0 %v1084
        %1228 = vmatpush1.bf16.msra.mxu0 %v1083
        %1229 = vmatprep.subr.bf16.mxu0 %v1087
        %1230 = vmatpush1.bf16.msra.mxu0 %v1086
        %1231 = vmatprep.subr.bf16.mxu0 %v1090
        %1232 = vmatpush1.bf16.msra.mxu0 %v1089
        %1233 = vmatprep.subr.bf16.mxu0 %v1093
        %1234 = vmatpush1.bf16.msra.mxu0 %v1092
        %1235 = vmatprep.subr.bf16.mxu0 %v1096
        %1236 = vmatpush1.bf16.msra.mxu0 %v1095
        %1237 = vmatprep.subr.bf16.mxu0 0
        %1238 = vmatpush1.bf16.msra.mxu0 0
        %1239 = vmatprep.subr.bf16.mxu0 0
        %1240 = vmatpush1.bf16.msra.mxu0 0
        %1241 = vmatprep.subr.bf16.mxu0 0
        %1242 = vmatpush1.bf16.msra.mxu0 0
        %1243 = vmatprep.subr.bf16.mxu0 0
        %1244 = vmatpush1.bf16.msra.mxu0 0
        %1245 = vmatprep.subr.bf16.mxu0 0
        %1246 = vmatpush1.bf16.msra.mxu0 0
        %1247 = vmatprep.subr.bf16.mxu0 0
        %1248 = vmatpush1.bf16.msra.mxu0 0
        %1249 = vmatprep.subr.bf16.mxu0 0
        %1250 = vmatpush1.bf16.msra.mxu0 0
        %1251 = vmatprep.mubr.bf16.mxu0 %v1174
        %1252 = vmatmul.mubr.bf16.gmra.mrb[0].mxu0 %v642
        %v1253 = vpop.f32.mrb[0].mxu0
        %v1254 = vadd.f32 %v1211, %v1253
        %v1255 = vpop.f32.mrb[0].mxu0
        %v1256 = vadd.f32 %v1213, %v1255
        %v1257 = vpop.f32.mrb[0].mxu0
        %v1258 = vadd.f32 %v1215, %v1257
        %v1259 = vpop.f32.mrb[0].mxu0
        %v1260 = vadd.f32 %v1217, %v1259
        %1261 = vdwg.mxu0
        %1262 = vmatprep.subr.bf16.mxu0 0
        %1263 = vmatpush1.bf16.msra.mxu0 %v1025
        %1264 = vmatprep.subr.bf16.mxu0 0
        %1265 = vmatpush1.bf16.msra.mxu0 %v1028
        %1266 = vmatprep.subr.bf16.mxu0 0
        %1267 = vmatpush1.bf16.msra.mxu0 %v1031
        %1268 = vmatprep.subr.bf16.mxu0 0
        %1269 = vmatpush1.bf16.msra.mxu0 %v1034
        %1270 = vmatprep.subr.bf16.mxu0 0
        %1271 = vmatpush1.bf16.msra.mxu0 %v1037
        %1272 = vmatprep.subr.bf16.mxu0 0
        %1273 = vmatpush1.bf16.msra.mxu0 %v1040
        %1274 = vmatprep.subr.bf16.mxu0 0
        %1275 = vmatpush1.bf16.msra.mxu0 %v1043
        %1276 = vmatprep.subr.bf16.mxu0 0
        %1277 = vmatpush1.bf16.msra.mxu0 %v1046
        %1278 = vmatprep.subr.bf16.mxu0 0
        %1279 = vmatpush1.bf16.msra.mxu0 %v1049
        %1280 = vmatprep.subr.bf16.mxu0 0
        %1281 = vmatpush1.bf16.msra.mxu0 %v1052
        %1282 = vmatprep.subr.bf16.mxu0 0
        %1283 = vmatpush1.bf16.msra.mxu0 %v1055
        %1284 = vmatprep.subr.bf16.mxu0 0
        %1285 = vmatpush1.bf16.msra.mxu0 %v1058
        %1286 = vmatprep.subr.bf16.mxu0 0
        %1287 = vmatpush1.bf16.msra.mxu0 %v1061
        %1288 = vmatprep.subr.bf16.mxu0 0
        %1289 = vmatpush1.bf16.msra.mxu0 %v1064
        %1290 = vmatprep.subr.bf16.mxu0 0
        %1291 = vmatpush1.bf16.msra.mxu0 %v1067
        %1292 = vmatprep.subr.bf16.mxu0 0
        %1293 = vmatpush1.bf16.msra.mxu0 %v1070
        %1294 = vmatprep.mubr.bf16.mxu0 %v641
        %1295 = vmatmul.mubr.bf16.gmra.mrb[0].mxu0 %v640
        %v1296 = vpop.f32.mrb[0].mxu0
        %v1297 = vadd.f32 %v772, %v1296
        %v1298 = vpop.f32.mrb[0].mxu0
        %v1299 = vpop.f32.mrb[0].mxu0
        %v1300 = vadd.f32 %v772, %v1299
        %v1301 = vpop.f32.mrb[0].mxu0
        %1302 = vdwg.mxu0
        %1303 = vmatprep.subr.bf16.mxu0 0
        %1304 = vmatpush1.bf16.msra.mxu0 %v1073
        %1305 = vmatprep.subr.bf16.mxu0 0
        %1306 = vmatpush1.bf16.msra.mxu0 %v1076
        %1307 = vmatprep.subr.bf16.mxu0 0
        %1308 = vmatpush1.bf16.msra.mxu0 %v1079
        %1309 = vmatprep.subr.bf16.mxu0 0
        %1310 = vmatpush1.bf16.msra.mxu0 %v1082
        %1311 = vmatprep.subr.bf16.mxu0 0
        %1312 = vmatpush1.bf16.msra.mxu0 %v1085
        %1313 = vmatprep.subr.bf16.mxu0 0
        %1314 = vmatpush1.bf16.msra.mxu0 %v1088
        %1315 = vmatprep.subr.bf16.mxu0 0
        %1316 = vmatpush1.bf16.msra.mxu0 %v1091
        %1317 = vmatprep.subr.bf16.mxu0 0
        %1318 = vmatpush1.bf16.msra.mxu0 %v1094
        %1319 = vmatprep.subr.bf16.mxu0 0
        %1320 = vmatpush1.bf16.msra.mxu0 %v1097
        %1321 = vmatprep.subr.bf16.mxu0 0
        %1322 = vmatpush1.bf16.msra.mxu0 0
        %1323 = vmatprep.subr.bf16.mxu0 0
        %1324 = vmatpush1.bf16.msra.mxu0 0
        %1325 = vmatprep.subr.bf16.mxu0 0
        %1326 = vmatpush1.bf16.msra.mxu0 0
        %1327 = vmatprep.subr.bf16.mxu0 0
        %1328 = vmatpush1.bf16.msra.mxu0 0
        %1329 = vmatprep.subr.bf16.mxu0 0
        %1330 = vmatpush1.bf16.msra.mxu0 0
        %1331 = vmatprep.subr.bf16.mxu0 0
        %1332 = vmatpush1.bf16.msra.mxu0 0
        %1333 = vmatprep.subr.bf16.mxu0 0
        %1334 = vmatpush1.bf16.msra.mxu0 0
        %1335 = vmatprep.mubr.bf16.mxu0 %v1174
        %1336 = vmatmul.mubr.bf16.gmra.mrb[0].mxu0 %v642
        %v1337 = vpop.f32.mrb[0].mxu0
        %v1338 = vadd.f32 %v1297, %v1337
        %v1339 = vpop.f32.mrb[0].mxu0
        %v1340 = vpop.f32.mrb[0].mxu0
        %v1341 = vadd.f32 %v1300, %v1340
        %v1342 = vpop.f32.mrb[0].mxu0
        %1343 = vdwg.mxu0
        %v1344 = vadd.f32 %v1254, %v1256
        %vm1345 = vcmask 359424
        %v1346 = vsel %vm1345, %v1338, 0.0
        %v1347 = vadd.f32 %v1344, %v1346
        %1348 = vadd.xlane.f32.xlu0 %v1347
        %v1349 = vpop.xlane.xlu0 %1348
        %v1350 = vadd.f32 %v1258, %v1260
        %v1351 = vsel %vm1345, %v1341, 0.0
        %v1352 = vadd.f32 %v1350, %v1351
        %1353 = vadd.xlane.f32.xlu0 %v1352
        %v1354 = vpop.xlane.xlu0 %1353
        %v1355 = vmul.f32 %v1254, %v1254
        %v1356 = vmul.f32 %v1256, %v1256
        %v1357 = vmul.f32 %v1338, %v1338
        %v1358 = vmul.f32 %v1258, %v1258
        %v1359 = vmul.f32 %v1260, %v1260
        %v1360 = vmul.f32 %v1341, %v1341
        %v1361 = vadd.f32 %v1355, %v1356
        %v1362 = vsel %vm1345, %v1357, 0.0
        %v1363 = vadd.f32 %v1361, %v1362
        %1364 = vadd.xlane.f32.xlu0 %v1363
        %v1365 = vpop.xlane.xlu0 %1364
        %v1366 = vadd.f32 %v1358, %v1359
        %v1367 = vsel %vm1345, %v1360, 0.0
        %v1368 = vadd.f32 %v1366, %v1367
        %1369 = vadd.xlane.f32.xlu0 %v1368
        %v1370 = vpop.xlane.xlu0 %1369
        %v1371 = vmul.f32 %v1349, 0.0033333334
        %v1372 = vmul.f32 %v1354, 0.0033333334
        %v1373 = vmul.f32 %v1365, 0.0033333334
        %v1374 = vmul.f32 %v1370, 0.0033333334
        %v1375 = vmul.f32 %v1371, %v1371
        %v1376 = vmul.f32 %v1372, %v1372
        %v1377 = vsub.f32 %v1373, %v1375
        %v1378 = vsub.f32 %v1374, %v1376
        %v1379 = vmax.f32 %v1377, 0.0
        %v1380 = vmax.f32 %v1378, 0.0
        %v1381 = vsub.f32 %v1254, %v1371
        %v1382 = vsub.f32 %v1256, %v1371
        %v1383 = vsub.f32 %v1338, %v1371
        %v1384 = vsub.f32 %v1258, %v1372
        %v1385 = vsub.f32 %v1260, %v1372
        %v1386 = vsub.f32 %v1341, %v1372
        %v1387 = vadd.f32 %v1379, 1e-05
        %v1388 = vadd.f32 %v1380, 1e-05
        %v1389 = vrsqrt.pop %v1387
        %v1390 = vrsqrt.pop %v1388
        %v1391 = vmul.f32 %v1381, %v1389
        %v1392 = vmul.f32 %v1382, %v1389
        %v1393 = vmul.f32 %v1383, %v1389
        %v1394 = vmul.f32 %v1384, %v1390
        %v1395 = vmul.f32 %v1385, %v1390
        %v1396 = vmul.f32 %v1386, %v1390
        %v1397 = vlaneseq
        %v1398 = vshrl.u32 %v1397, 7
        %v1399 = vsub.s32 1, %v1398
        %v1400 = vrot.slane %v638, %v1399
        %v1401 = vlaneseq
        %v1402 = vshrl.u32 %v1401, 7
        %v1403 = vsub.s32 5, %v1402
        %v1404 = vrot.slane %v638, %v1403
        %v1405 = vlaneseq
        %v1406 = vshrl.u32 %v1405, 7
        %v1407 = vsub.s32 1, %v1406
        %v1408 = vrot.slane %v639, %v1407
        %v1412 = vlaneseq
        %v1413 = vshrl.u32 %v1412, 7
        %v1414 = vsub.s32 1, %v1413
        %v1415 = vrot.slane %v1400, %v1414
        %v1416 = vlaneseq
        %v1417 = vshrl.u32 %v1416, 7
        %v1418 = vsub.s32 1, %v1417
        %v1419 = vrot.slane %v1404, %v1418
        %v1420 = vlaneseq
        %v1421 = vshrl.u32 %v1420, 7
        %v1422 = vsub.s32 1, %v1421
        %v1423 = vrot.slane %v1408, %v1422
        %v1424 = vmul.f32 %v1391, %v1415
        %v1425 = vmul.f32 %v1392, %v1419
        %v1426 = vmul.f32 %v1393, %v1423
        %v1427 = vmul.f32 %v1394, %v1415
        %v1428 = vmul.f32 %v1395, %v1419
        %v1429 = vmul.f32 %v1396, %v1423
        %v1430 = vlaneseq
        %v1431 = vshrl.u32 %v1430, 7
        %v1432 = vsub.s32 2, %v1431
        %v1433 = vrot.slane %v638, %v1432
        %v1434 = vlaneseq
        %v1435 = vshrl.u32 %v1434, 7
        %v1436 = vsub.s32 6, %v1435
        %v1437 = vrot.slane %v638, %v1436
        %v1438 = vlaneseq
        %v1439 = vshrl.u32 %v1438, 7
        %v1440 = vsub.s32 2, %v1439
        %v1441 = vrot.slane %v639, %v1440
        %v1445 = vlaneseq
        %v1446 = vshrl.u32 %v1445, 7
        %v1447 = vsub.s32 2, %v1446
        %v1448 = vrot.slane %v1433, %v1447
        %v1449 = vlaneseq
        %v1450 = vshrl.u32 %v1449, 7
        %v1451 = vsub.s32 2, %v1450
        %v1452 = vrot.slane %v1437, %v1451
        %v1453 = vlaneseq
        %v1454 = vshrl.u32 %v1453, 7
        %v1455 = vsub.s32 2, %v1454
        %v1456 = vrot.slane %v1441, %v1455
        %v1457 = vadd.f32 %v1424, %v1448
        %v1458 = vadd.f32 %v1425, %v1452
        %v1459 = vadd.f32 %v1426, %v1456
        %v1460 = vadd.f32 %v1427, %v1448
        %v1461 = vadd.f32 %v1428, %v1452
        %v1462 = vadd.f32 %v1429, %v1456
        %v1463 = vmax.f32 %v1457, 0.0
        %v1464 = vmax.f32 %v1458, 0.0
        %v1465 = vmax.f32 %v1459, 0.0
        %v1466 = vmax.f32 %v1460, 0.0
        %v1467 = vmax.f32 %v1461, 0.0
        %v1468 = vmax.f32 %v1462, 0.0
        %v1469 = vpack.c.bf16 %v1466, %v1463
        %v1470 = vpack.c.bf16 %v1467, %v1464
        %v1471 = vpack.c.bf16 %v1468, %v1465
        %v1472 = vld [vmem:[%s5] sm:$0xf]
        %v1473 = vld [vmem:[%s5 + $0x4] sm:$0xf]
        %v1474 = vld [vmem:[%s5 + $0x8] sm:$0xf]
        %v1475 = vld [vmem:[%s5 + $0xc] sm:$0xf]
        %v1476 = vld [vmem:[%s5 + $0x10] sm:$0xf]
        %v1477 = vld [vmem:[%s5 + $0x14] sm:$0xf]
        %v1478 = vld [vmem:[%s5 + $0x18] sm:$0xf]
        %v1479 = vld [vmem:[%s5 + $0x1c] sm:$0xf]
        %v1480 = vld [vmem:[%s5 + $0x20] sm:$0xf]
        %v1481 = vld [vmem:[%s5 + $0x24] sm:$0xf]
        %v1482 = vld [vmem:[%s5 + $0x28] sm:$0xf]
        %v1483 = vld [vmem:[%s5 + $0x2c] sm:$0xf]
        %v1484 = vld [vmem:[%s5 + $0x30] sm:$0xf]
        %v1485 = vld [vmem:[%s5 + $0x34] sm:$0xf]
        %v1486 = vld [vmem:[%s5 + $0x38] sm:$0xf]
        %v1487 = vld [vmem:[%s5 + $0x3c] sm:$0xf]
        %v1488 = vld [vmem:[%s5 + $0x40] sm:$0xf]
        %v1489 = vld [vmem:[%s5 + $0x44] sm:$0xf]
        %v1490 = vld [vmem:[%s5 + $0x48] sm:$0xf]
        %v1491 = vld [vmem:[%s5 + $0x4c] sm:$0xf]
        %v1492 = vld [vmem:[%s5 + $0x50] sm:$0xf]
        %v1493 = vld [vmem:[%s5 + $0x54] sm:$0xf]
        %v1494 = vld [vmem:[%s5 + $0x58] sm:$0xf]
        %v1495 = vld [vmem:[%s5 + $0x5c] sm:$0xf]
        %v1496 = vld [vmem:[%s5 + $0x60] sm:$0xf]
        %v1497 = vld [vmem:[%s5 + $0x64] sm:$0xf]
        %v1498 = vld [vmem:[%s5 + $0x68] sm:$0xf]
        %v1499 = vld [vmem:[%s5 + $0x6c] sm:$0xf]
        %v1500 = vld [vmem:[%s5 + $0x70] sm:$0xf]
        %v1501 = vld [vmem:[%s5 + $0x74] sm:$0xf]
        %v1502 = vld [vmem:[%s5 + $0x78] sm:$0xf]
        %v1503 = vld [vmem:[%s5 + $0x7c] sm:$0xf]
        %v1504 = vld [vmem:[%s5 + $0x80] sm:$0xf]
        %v1505 = vld [vmem:[%s5 + $0x84] sm:$0xf]
        %v1506 = vld [vmem:[%s5 + $0x88] sm:$0xf]
        %v1507 = vld [vmem:[%s5 + $0x8c] sm:$0xf]
        %v1508 = vld [vmem:[%s5 + $0x90] sm:$0xf]
        %v1509 = vld [vmem:[%s5 + $0x94] sm:$0x3]
        %v1510 = vld [vmem:[%s6] sm:$0x1]
        %v1512 = vlaneseq
        %v1513 = vshrl.u32 %v1512, 7
        %v1514 = vsub.s32 0, %v1513
        %v1515 = vrot.slane %v1510, %v1514
        %v1555 = vunpack.c.l.b16 %v1472
        %v1556 = vunpack.c.l.b16 %v1473
        %v1557 = vunpack.c.l.b16 %v1474
        %v1558 = vunpack.c.l.b16 %v1475
        %v1559 = vunpack.c.l.b16 %v1476
        %v1560 = vunpack.c.l.b16 %v1477
        %v1561 = vunpack.c.l.b16 %v1478
        %v1562 = vunpack.c.l.b16 %v1479
        %v1563 = vunpack.c.l.b16 %v1480
        %v1564 = vunpack.c.l.b16 %v1481
        %v1565 = vunpack.c.l.b16 %v1482
        %v1566 = vunpack.c.l.b16 %v1483
        %v1567 = vunpack.c.l.b16 %v1484
        %v1568 = vunpack.c.l.b16 %v1485
        %v1569 = vunpack.c.l.b16 %v1486
        %v1570 = vunpack.c.l.b16 %v1487
        %v1571 = vunpack.c.l.b16 %v1488
        %v1572 = vunpack.c.l.b16 %v1489
        %v1573 = vunpack.c.l.b16 %v1490
        %v1574 = vunpack.c.l.b16 %v1491
        %v1575 = vunpack.c.l.b16 %v1492
        %v1576 = vunpack.c.l.b16 %v1493
        %v1577 = vunpack.c.l.b16 %v1494
        %v1578 = vunpack.c.l.b16 %v1495
        %v1579 = vunpack.c.l.b16 %v1496
        %v1580 = vunpack.c.l.b16 %v1497
        %v1581 = vunpack.c.l.b16 %v1498
        %v1582 = vunpack.c.l.b16 %v1499
        %v1583 = vunpack.c.l.b16 %v1500
        %v1584 = vunpack.c.l.b16 %v1501
        %v1585 = vunpack.c.l.b16 %v1502
        %v1586 = vunpack.c.l.b16 %v1503
        %v1587 = vunpack.c.l.b16 %v1504
        %v1588 = vunpack.c.l.b16 %v1505
        %v1589 = vunpack.c.l.b16 %v1506
        %v1590 = vunpack.c.l.b16 %v1507
        %v1591 = vunpack.c.l.b16 %v1508
        %v1592 = vunpack.c.l.b16 %v1509
        %v1593 = vpack.c.b16 %v1556, %v1555
        %v1594 = vpack.c.b16 %v1558, %v1557
        %v1595 = vpack.c.b16 %v1560, %v1559
        %v1596 = vpack.c.b16 %v1562, %v1561
        %v1597 = vpack.c.b16 %v1564, %v1563
        %v1598 = vpack.c.b16 %v1566, %v1565
        %v1599 = vpack.c.b16 %v1568, %v1567
        %v1600 = vpack.c.b16 %v1570, %v1569
        %v1601 = vpack.c.b16 %v1572, %v1571
        %v1602 = vpack.c.b16 %v1574, %v1573
        %v1603 = vpack.c.b16 %v1576, %v1575
        %v1604 = vpack.c.b16 %v1578, %v1577
        %v1605 = vpack.c.b16 %v1580, %v1579
        %v1606 = vpack.c.b16 %v1582, %v1581
        %v1607 = vpack.c.b16 %v1584, %v1583
        %v1608 = vpack.c.b16 %v1586, %v1585
        %v1609 = vpack.c.b16 %v1588, %v1587
        %v1610 = vpack.c.b16 %v1590, %v1589
        %v1611 = vpack.c.b16 %v1592, %v1591
        %v1631 = vsel %vm1345, %v1471, 0
        %vm1633 = vcmask 1045504
        %v1635 = vsel %vm1633, %v1611, 0
        %1637 = vmatprep.subr.bf16.mxu0 0
        %1638 = vmatpush1.bf16.msra.mxu0 %v1593
        %1639 = vmatprep.subr.bf16.mxu0 0
        %1640 = vmatpush1.bf16.msra.mxu0 %v1594
        %1641 = vmatprep.subr.bf16.mxu0 0
        %1642 = vmatpush1.bf16.msra.mxu0 %v1595
        %1643 = vmatprep.subr.bf16.mxu0 0
        %1644 = vmatpush1.bf16.msra.mxu0 %v1596
        %1645 = vmatprep.subr.bf16.mxu0 0
        %1646 = vmatpush1.bf16.msra.mxu0 %v1597
        %1647 = vmatprep.subr.bf16.mxu0 0
        %1648 = vmatpush1.bf16.msra.mxu0 %v1598
        %1649 = vmatprep.subr.bf16.mxu0 0
        %1650 = vmatpush1.bf16.msra.mxu0 %v1599
        %1651 = vmatprep.subr.bf16.mxu0 0
        %1652 = vmatpush1.bf16.msra.mxu0 %v1600
        %1653 = vmatprep.subr.bf16.mxu0 0
        %1654 = vmatpush1.bf16.msra.mxu0 %v1601
        %1655 = vmatprep.subr.bf16.mxu0 0
        %1656 = vmatpush1.bf16.msra.mxu0 %v1602
        %1657 = vmatprep.subr.bf16.mxu0 0
        %1658 = vmatpush1.bf16.msra.mxu0 %v1603
        %1659 = vmatprep.subr.bf16.mxu0 0
        %1660 = vmatpush1.bf16.msra.mxu0 %v1604
        %1661 = vmatprep.subr.bf16.mxu0 0
        %1662 = vmatpush1.bf16.msra.mxu0 %v1605
        %1663 = vmatprep.subr.bf16.mxu0 0
        %1664 = vmatpush1.bf16.msra.mxu0 %v1606
        %1665 = vmatprep.subr.bf16.mxu0 0
        %1666 = vmatpush1.bf16.msra.mxu0 %v1607
        %1667 = vmatprep.subr.bf16.mxu0 0
        %1668 = vmatpush1.bf16.msra.mxu0 %v1608
        %1669 = vmatprep.mubr.bf16.mxu0 %v1470
        %1670 = vmatmul.mubr.bf16.gmra.mrb[0].mxu0 %v1469
        %v1671 = vpop.f32.mrb[0].mxu0
        %v1672 = vadd.f32 %v1515, %v1671
        %v1673 = vpop.f32.mrb[0].mxu0
        %v1674 = vpop.f32.mrb[0].mxu0
        %v1675 = vadd.f32 %v1515, %v1674
        %v1676 = vpop.f32.mrb[0].mxu0
        %1677 = vdwg.mxu0
        %1678 = vmatprep.subr.bf16.mxu0 0
        %1679 = vmatpush1.bf16.msra.mxu0 %v1609
        %1680 = vmatprep.subr.bf16.mxu0 0
        %1681 = vmatpush1.bf16.msra.mxu0 %v1610
        %1682 = vmatprep.subr.bf16.mxu0 0
        %1683 = vmatpush1.bf16.msra.mxu0 %v1635
        %1684 = vmatprep.subr.bf16.mxu0 0
        %1685 = vmatpush1.bf16.msra.mxu0 0
        %1686 = vmatprep.subr.bf16.mxu0 0
        %1687 = vmatpush1.bf16.msra.mxu0 0
        %1688 = vmatprep.subr.bf16.mxu0 0
        %1689 = vmatpush1.bf16.msra.mxu0 0
        %1690 = vmatprep.subr.bf16.mxu0 0
        %1691 = vmatpush1.bf16.msra.mxu0 0
        %1692 = vmatprep.subr.bf16.mxu0 0
        %1693 = vmatpush1.bf16.msra.mxu0 0
        %1694 = vmatprep.subr.bf16.mxu0 0
        %1695 = vmatpush1.bf16.msra.mxu0 0
        %1696 = vmatprep.subr.bf16.mxu0 0
        %1697 = vmatpush1.bf16.msra.mxu0 0
        %1698 = vmatprep.subr.bf16.mxu0 0
        %1699 = vmatpush1.bf16.msra.mxu0 0
        %1700 = vmatprep.subr.bf16.mxu0 0
        %1701 = vmatpush1.bf16.msra.mxu0 0
        %1702 = vmatprep.subr.bf16.mxu0 0
        %1703 = vmatpush1.bf16.msra.mxu0 0
        %1704 = vmatprep.subr.bf16.mxu0 0
        %1705 = vmatpush1.bf16.msra.mxu0 0
        %1706 = vmatprep.subr.bf16.mxu0 0
        %1707 = vmatpush1.bf16.msra.mxu0 0
        %1708 = vmatprep.subr.bf16.mxu0 0
        %1709 = vmatpush1.bf16.msra.mxu0 0
        %1710 = vmatprep.mubr.bf16.mxu0 0
        %1711 = vmatmul.mubr.bf16.gmra.mrb[0].mxu0 %v1631
        %v1712 = vpop.f32.mrb[0].mxu0
        %v1713 = vadd.f32 %v1672, %v1712
        %v1714 = vpop.f32.mrb[0].mxu0
        %v1715 = vpop.f32.mrb[0].mxu0
        %v1716 = vadd.f32 %v1675, %v1715
        %v1717 = vpop.f32.mrb[0].mxu0
        %1718 = vdwg.mxu0
        %v1719 = vtanh.pop %v1713
        %v1720 = vtanh.pop %v1716
        %vm1721 = vcmask 64512
        %1722 = vst.msk [vmem:[%s295] sm:$0xff] %vm1721, %v1719
        %1723 = vst.msk [vmem:[%s295 + $0x8] sm:$0xff] %vm1721, %v1720
        %s1724 = smul.u32 2, %s19
        %p1725 = scmp.lt.s32.totalorder %s1724, 3
        %s1726 = scalar_select %p1725, %s1724, 3
        %s1727 = smul.addr %s1726, 8
        %s1728 = scalar_lea.vmem %s7, %s1727
        // Predicated region
        $region53: #{actor_forward.1} parent=47 // pred_check
          %p1729 = pneg %p189
        $region54: #{actor_forward.1} parent=47 // pred_check_branch
          %1731 = sbr.rel (%p1729) target = $region56
        $region55: #{actor_forward.1} parent=47 // pred_region
          %s1732 = smul.u32 2, %s19
        $region56: #{actor_forward.1} parent=47 // pred_fallthru
          _
      $region48: #{actor_forward.1} parent=5 // pred_fallthru
        _
      %p1733 = scmp.le.s32.totalorder 2, %s14
      // Predicated region
      $region57: #{actor_forward.1} parent=5 // pred_check
        %p1734 = pneg %p1733
      $region58: #{actor_forward.1} parent=5 // pred_check_branch
        %1736 = sbr.rel (%p1734) target = $region60
      $region59: #{actor_forward.1} parent=5 // pred_region
        %s1737 = ssub.s32 %s14, 2
        // Predicated region
        $region61: #{actor_forward.1} parent=59 // pred_check
          %p1738 = pneg %p195
        $region62: #{actor_forward.1} parent=59 // pred_check_branch
          %1740 = sbr.rel (%p1738) target = $region64
        $region63: #{actor_forward.1} parent=59 // pred_region
          %s1741 = smul.u32 2, %s20
          %p1742 = scmp.lt.s32.totalorder %s1741, 3
          %s1743 = scalar_select %p1742, %s1741, 3
          %s1744 = smul.addr %s1743, 8
          %s1745 = scalar_lea.vmem %s7, %s1744
        $region64: #{actor_forward.1} parent=59 // pred_fallthru
          _
      $region60: #{actor_forward.1} parent=5 // pred_fallthru
        _
    $region6: #{actor_forward.1} parent=1 // loop_footer
      %s18 = sadd.s32 1, %s14
    $region7: #{actor_forward.1} parent=1 // loop_footer_branch
      %13 = sbr.rel target = $region3
    $region8: #{actor_forward.1} parent=1 // loop_exit
      _
    %1746 = vsyncpa [#allocation3], 1
    %s1747 = scalar_lea.sflag [#allocation3], 1
    %1748 = vsyncpa %s1747, 1

</llo_original>
